<compile_context>
chip_gen: v5e
topology: v5e:2x2
jax: 0.10.0
libtpu: 0.0.40
codegen_flags: <defaults>
</compile_context>

<pallas_src>
import functools

import jax
import jax.numpy as jnp
import numpy as np
from jax.experimental import pallas as pl
from jax.experimental.pallas import tpu as pltpu

EPS = 1e-5  # torch.nn.LayerNorm default eps


def _layernorm(x, gamma, beta):
    mu = jnp.mean(x, axis=-1, keepdims=True)
    var = jnp.mean(jnp.square(x - mu), axis=-1, keepdims=True)
    return (x - mu) * jax.lax.rsqrt(var + EPS) * gamma + beta


def _gelu(x):
    # TODO(synk): torch nn.GELU() uses the exact erf form; the tanh
    # approximation is kept for guaranteed Mosaic lowering (~1e-3 rel. diff).
    return jax.nn.gelu(x, approximate=True)


# ----------------------------------------------------------------------------
# Fused kernel: patch embed -> depth x gMLP block -> head, for one batch chunk
# ----------------------------------------------------------------------------
def _gmlp_fused_kernel(
    x_ref, embed_w, embed_b,
    ln1_g, ln1_b, w_in_res, b_in_res, w_in_gate, b_in_gate,
    lng_g, lng_b, w_gate, b_gate, w_out, b_out,
    pool_mat, head_ln_g, head_ln_b, cls_w, cls_b,
    o_ref, *, depth, b_blk, n_patches,
):
    bf16 = jnp.bfloat16
    f32 = jnp.float32
    x = x_ref[0]                                                  # (rows, P)

    # Patch embedding: Linear(patch_size -> model_dim) over all rows at once.
    h = jnp.dot(x.astype(bf16), embed_w[...],
                preferred_element_type=f32) + embed_b[...]

    # depth x ResidualBlock(LayerNormWrapper(gMLPBlock)).
    # TODO(synk): for deep stacks convert this static unroll to lax.fori_loop
    # with dynamic first-axis weight indexing to bound vreg live ranges.
    for l in range(depth):
        xn = _layernorm(h, ln1_g[l], ln1_b[l])
        xnb = xn.astype(bf16)                      # one bf16 copy, reused
        # input_proj (w_in pre-split into res/gate halves in the wrapper).
        res = _gelu(jnp.dot(xnb, w_in_res[l],
                            preferred_element_type=f32) + b_in_res[l])
        gate = _gelu(jnp.dot(xnb, w_in_gate[l],
                             preferred_element_type=f32) + b_in_gate[l])
        # GatingUnit (heads=1, causal=False, circulant=False, Identity act.).
        gate = _layernorm(gate, lng_g[l], lng_b[l])
        # Spatial gating: dense, tiny (N,N)@(N,F/2) dot per batch element of
        # the chunk, in f32 (w_gate ~1e-4 magnitude; keeps precision, no kron).
        w_g = w_gate[l]                            # (N, N)   f32
        b_g = b_gate[l]                            # (N, F/2) f32, lane-dense
        parts = []
        for b in range(b_blk):
            g_b = gate[b * n_patches:(b + 1) * n_patches, :]
            parts.append(jnp.dot(w_g, g_b, preferred_element_type=f32) + b_g)
        gated = parts[0] if b_blk == 1 else jnp.concatenate(parts, axis=0)
        gated = gated * res
        # output_proj + residual.
        y = jnp.dot(gated.astype(bf16), w_out[l],
                    preferred_element_type=f32) + b_out[l]
        h = y + h

    # Head: mean over patches as an MXU matmul (pool_mat = kron(I_b,
    # ones(1,N))/N, a trace-time constant) -> LayerNorm -> padded classifier.
    pooled = jnp.dot(pool_mat[...], h, preferred_element_type=f32)  # (b, D)
    pooled = _layernorm(pooled, head_ln_g[...], head_ln_b[...])
    o_ref[0] = jnp.dot(pooled.astype(bf16), cls_w[...],
                       preferred_element_type=f32) + cls_b[...]


def _resident_spec(arr):
    """Full-array block with a grid-invariant index map: DMA'd once and kept
    resident in VMEM across grid steps (Pallas elides unchanged-block copies).
    With the default num_chunks=1 there is a single grid step, so there is no
    double-buffer waste either."""
    zeros = (0,) * arr.ndim
    return pl.BlockSpec(arr.shape, lambda i, _z=zeros: _z)


def _has_two_tensorcores():
    """v7x exposes 2 TensorCores per chip; v5e/v6e run the grid serially."""
    try:
        kind = jax.devices()[0].device_kind.lower()
    except Exception:  # pragma: no cover - defensive
        return False
    return ("v7" in kind) or ("7x" in kind)


# ----------------------------------------------------------------------------
# Wrapper
# ----------------------------------------------------------------------------
@functools.partial(jax.jit, static_argnames=("patch_size", "num_chunks"))
def gmlp_forward(x, params, *, patch_size, num_chunks=None):
    B, S = x.shape
    N = S // patch_size
    P = patch_size
    if num_chunks is None:
        # Generation-aware chunking: only split the batch when a second
        # TensorCore can actually take the other chunk (v7x); on v5e/v6e one
        # chunk keeps the matmul M dimension maximal and avoids per-step
        # pipeline overhead.
        num_chunks = 2 if (_has_two_tensorcores()
                           and B >= 2 and B % 2 == 0) else 1
    assert B % num_chunks == 0
    b_blk = B // num_chunks
    rows = b_blk * N

    layers = params["layers"]
    depth = len(layers)
    D = params["embed_w"].shape[1]
    F = layers[0]["w_in"].shape[1]
    F2 = F // 2
    C = params["cls_w"].shape[1]
    # Lane-dense output: pad the classifier width up to a 128-lane multiple so
    # the kernel's output store is an unmasked vst; sliced back below.
    C_pad = max(128, ((C + 127) // 128) * 128)

    bf16 = jnp.bfloat16
    stack = lambda key: jnp.stack([lp[key] for lp in layers])

    # nn.Unflatten(1, (N, P)) + batch chunking: (B, S) -> (chunks, rows, P).
    xp = x.reshape(num_chunks, rows, P)

    w_in = stack("w_in")                          # (depth, D, F)
    b_in = stack("b_in")                          # (depth, 1, F)

    # Gating bias (N, 1) pre-broadcast lane-dense to (N, F2) per layer so the
    # kernel never adds a lane-width-1 column vector (one relayout per layer
    # saved).  Tiny: depth * N * F2 floats.
    b_gate_lane = jnp.stack(
        [jnp.broadcast_to(lp["b_gate"], (N, F2)) for lp in layers])

    # Mean-pool-over-patches as a matmul.  Built from concrete constants only,
    # so it is a trace-time constant (no per-call XLA work, unlike the old
    # kron of traced gating weights).
    pool_mat = jnp.kron(jnp.eye(b_blk, dtype=jnp.float32),
                        jnp.full((1, N), 1.0 / N, jnp.float32))   # (b_blk, rows)

    cls_w_pad = jnp.pad(params["cls_w"].astype(bf16), ((0, 0), (0, C_pad - C)))
    cls_b_pad = jnp.pad(params["cls_b"], ((0, 0), (0, C_pad - C)))

    args = (
        xp,
        params["embed_w"].astype(bf16), params["embed_b"],
        stack("ln1_g"), stack("ln1_b"),
        w_in[:, :, :F2].astype(bf16), b_in[:, :, :F2],
        w_in[:, :, F2:].astype(bf16), b_in[:, :, F2:],
        stack("lng_g"), stack("lng_b"),
        stack("w_gate"), b_gate_lane,             # gating kept in f32
        stack("w_out").astype(bf16), stack("b_out"),
        pool_mat,
        params["head_ln_g"], params["head_ln_b"],
        cls_w_pad, cls_b_pad,
    )

    kernel = functools.partial(
        _gmlp_fused_kernel, depth=depth, b_blk=b_blk, n_patches=N)

    in_specs = [pl.BlockSpec((1, rows, P), lambda i: (i, 0, 0))]
    in_specs += [_resident_spec(a) for a in args[1:]]

    out = pl.pallas_call(
        kernel,
        out_shape=jax.ShapeDtypeStruct((num_chunks, b_blk, C_pad), jnp.float32),
        grid=(num_chunks,),
        in_specs=in_specs,
        out_specs=pl.BlockSpec((1, b_blk, C_pad), lambda i: (i, 0, 0)),
        compiler_params=pltpu.CompilerParams(
            dimension_semantics=("parallel",)),
    )(*args)
    return out.reshape(B, C_pad)[:, :C]


# ----------------------------------------------------------------------------
# Deterministic parameter init (shapes per gMLP.__init__; synthetic values)
# ----------------------------------------------------------------------------
def init_params(key, patch_size, num_patches, model_dim, ff_dim, num_classes,
                depth):
    f_half = ff_dim // 2
    keys = jax.random.split(key, 2 + depth)
    params = {
        "embed_w": 0.02 * jax.random.normal(keys[0], (patch_size, model_dim),
                                            jnp.float32),
        "embed_b": jnp.zeros((1, model_dim), jnp.float32),
        "head_ln_g": jnp.ones((1, model_dim), jnp.float32),
        "head_ln_b": jnp.zeros((1, model_dim), jnp.float32),
        "cls_w": 0.02 * jax.random.normal(keys[1], (model_dim, num_classes),
                                          jnp.float32),
        "cls_b": jnp.zeros((1, num_classes), jnp.float32),
        "layers": [],
    }
    for i in range(depth):
        lk = jax.random.split(keys[2 + i], 3)
        params["layers"].append({
            "ln1_g": jnp.ones((1, model_dim), jnp.float32),
            "ln1_b": jnp.zeros((1, model_dim), jnp.float32),
            "w_in": 0.05 * jax.random.normal(lk[0], (model_dim, ff_dim),
                                             jnp.float32),
            "b_in": 0.01 * jnp.ones((1, ff_dim), jnp.float32),
            "lng_g": jnp.ones((1, f_half), jnp.float32),
            "lng_b": jnp.zeros((1, f_half), jnp.float32),
            # GatingUnit: heads=1 squeezed -> (N, N) weights, (N, 1) biases
            "w_gate": jax.random.uniform(
                lk[1], (num_patches, num_patches), jnp.float32,
                minval=-1e-3 / num_patches, maxval=1e-3 / num_patches),
            "b_gate": jnp.ones((num_patches, 1), jnp.float32),
            "w_out": 0.05 * jax.random.normal(lk[2], (f_half, model_dim),
                                              jnp.float32),
            "b_out": jnp.zeros((1, model_dim), jnp.float32),
        })
    return params


# ----------------------------------------------------------------------------
# Pure-JAX f32 reference (same structure as the PyTorch module)
# ----------------------------------------------------------------------------
def reference_forward(x, params, patch_size):
    B, S = x.shape
    N = S // patch_size
    h = x.reshape(B, N, patch_size) @ params["embed_w"] + params["embed_b"]
    for lp in params["layers"]:
        f_half = lp["w_in"].shape[1] // 2
        xn = _layernorm(h, lp["ln1_g"], lp["ln1_b"])
        hh = _gelu(xn @ lp["w_in"] + lp["b_in"])
        res, gate = hh[..., :f_half], hh[..., f_half:]
        gate = _layernorm(gate, lp["lng_g"], lp["lng_b"])
        gated = jnp.einsum("nm,bmf->bnf", lp["w_gate"], gate) + lp["b_gate"][None]
        gated = gated * res
        h = gated @ lp["w_out"] + lp["b_out"] + h
    pooled = jnp.mean(h, axis=1)
    pooled = _layernorm(pooled, params["head_ln_g"], params["head_ln_b"])
    return pooled @ params["cls_w"] + params["cls_b"]


if __name__ == "__main__":
    B = 2
    patch_size = 4
    seq_len = 32                         # total sequence length (flat features)
    num_patches = seq_len // patch_size  # = 8  (the gating "seq_len")
    model_dim = 32
    depth = 2
    ff_multiplier = 4
    ff_dim = model_dim * ff_multiplier   # 128
    num_classes = 4

    key = jax.random.PRNGKey(0)
    k_x, k_p = jax.random.split(key)
    x = jax.random.normal(k_x, (B, seq_len), jnp.float32)
    params = init_params(k_p, patch_size, num_patches, model_dim, ff_dim,
                         num_classes, depth)

    out = gmlp_forward(x, params, patch_size=patch_size)
    out = jax.block_until_ready(out)

    ref = reference_forward(x, params, patch_size)
    ref = jax.block_until_ready(ref)

    # Tolerance sized for the bf16 MXU path (reference is pure f32).
    if not np.allclose(np.asarray(out), np.asarray(ref), atol=2e-2, rtol=2e-2):
        raise AssertionError(
            f"Pallas/JAX mismatch: max abs diff "
            f"{np.max(np.abs(np.asarray(out) - np.asarray(ref)))}")
    print("KERNEL_OK")
</pallas_src>

<mosaic_0001>
module attributes {stable_mosaic.version = 11 : i64} {
  func.func @_gmlp_fused_kernel(%arg0: i32, %arg1: memref<1x16x4xf32, #tpu.memory_space<vmem>>, %arg2: memref<4x32xbf16, #tpu.memory_space<vmem>>, %arg3: memref<1x32xf32, #tpu.memory_space<vmem>>, %arg4: memref<2x1x32xf32, #tpu.memory_space<vmem>>, %arg5: memref<2x1x32xf32, #tpu.memory_space<vmem>>, %arg6: memref<2x32x64xbf16, #tpu.memory_space<vmem>>, %arg7: memref<2x1x64xf32, #tpu.memory_space<vmem>>, %arg8: memref<2x32x64xbf16, #tpu.memory_space<vmem>>, %arg9: memref<2x1x64xf32, #tpu.memory_space<vmem>>, %arg10: memref<2x1x64xf32, #tpu.memory_space<vmem>>, %arg11: memref<2x1x64xf32, #tpu.memory_space<vmem>>, %arg12: memref<2x8x8xf32, #tpu.memory_space<vmem>>, %arg13: memref<2x8x64xf32, #tpu.memory_space<vmem>>, %arg14: memref<2x64x32xbf16, #tpu.memory_space<vmem>>, %arg15: memref<2x1x32xf32, #tpu.memory_space<vmem>>, %arg16: memref<2x16xf32, #tpu.memory_space<vmem>>, %arg17: memref<1x32xf32, #tpu.memory_space<vmem>>, %arg18: memref<1x32xf32, #tpu.memory_space<vmem>>, %arg19: memref<32x128xbf16, #tpu.memory_space<vmem>>, %arg20: memref<1x128xf32, #tpu.memory_space<vmem>>, %arg21: memref<1x2x128xf32, #tpu.memory_space<vmem>>) attributes {dimension_semantics = [#tpu.dimension_semantics<parallel>], iteration_bounds = array<i64: 1>, scalar_prefetch = 0 : i64, scratch_operands = 0 : i64, tpu.core_type = #tpu.core_type<tc>, window_params = [{transform_indices = @transform_0, window_bounds = array<i64: 1, 16, 4>}, {pipeline_mode = #tpu.pipeline_mode<synchronous>, transform_indices = @transform_1, window_bounds = array<i64: 4, 32>}, {pipeline_mode = #tpu.pipeline_mode<synchronous>, transform_indices = @transform_2, window_bounds = array<i64: 1, 32>}, {pipeline_mode = #tpu.pipeline_mode<synchronous>, transform_indices = @transform_3, window_bounds = array<i64: 2, 1, 32>}, {pipeline_mode = #tpu.pipeline_mode<synchronous>, transform_indices = @transform_4, window_bounds = array<i64: 2, 1, 32>}, {pipeline_mode = #tpu.pipeline_mode<synchronous>, transform_indices = @transform_5, window_bounds = array<i64: 2, 32, 64>}, {pipeline_mode = #tpu.pipeline_mode<synchronous>, transform_indices = @transform_6, window_bounds = array<i64: 2, 1, 64>}, {pipeline_mode = #tpu.pipeline_mode<synchronous>, transform_indices = @transform_7, window_bounds = array<i64: 2, 32, 64>}, {pipeline_mode = #tpu.pipeline_mode<synchronous>, transform_indices = @transform_8, window_bounds = array<i64: 2, 1, 64>}, {pipeline_mode = #tpu.pipeline_mode<synchronous>, transform_indices = @transform_9, window_bounds = array<i64: 2, 1, 64>}, {pipeline_mode = #tpu.pipeline_mode<synchronous>, transform_indices = @transform_10, window_bounds = array<i64: 2, 1, 64>}, {pipeline_mode = #tpu.pipeline_mode<synchronous>, transform_indices = @transform_11, window_bounds = array<i64: 2, 8, 8>}, {pipeline_mode = #tpu.pipeline_mode<synchronous>, transform_indices = @transform_12, window_bounds = array<i64: 2, 8, 64>}, {pipeline_mode = #tpu.pipeline_mode<synchronous>, transform_indices = @transform_13, window_bounds = array<i64: 2, 64, 32>}, {pipeline_mode = #tpu.pipeline_mode<synchronous>, transform_indices = @transform_14, window_bounds = array<i64: 2, 1, 32>}, {pipeline_mode = #tpu.pipeline_mode<synchronous>, transform_indices = @transform_15, window_bounds = array<i64: 2, 16>}, {pipeline_mode = #tpu.pipeline_mode<synchronous>, transform_indices = @transform_16, window_bounds = array<i64: 1, 32>}, {pipeline_mode = #tpu.pipeline_mode<synchronous>, transform_indices = @transform_17, window_bounds = array<i64: 1, 32>}, {pipeline_mode = #tpu.pipeline_mode<synchronous>, transform_indices = @transform_18, window_bounds = array<i64: 32, 128>}, {pipeline_mode = #tpu.pipeline_mode<synchronous>, transform_indices = @transform_19, window_bounds = array<i64: 1, 128>}, {transform_indices = @transform_20, window_bounds = array<i64: 1, 2, 128>}]} {
    %c0 = arith.constant 0 : index
    %c0_0 = arith.constant 0 : index
    %c0_1 = arith.constant 0 : index
    %0 = vector.load %arg1[%c0, %c0_0, %c0_1] : memref<1x16x4xf32, #tpu.memory_space<vmem>>, vector<1x16x4xf32>
    %1 = vector.shape_cast %0 : vector<1x16x4xf32> to vector<16x4xf32>
    %2 = arith.truncf %1 : vector<16x4xf32> to vector<16x4xbf16>
    %c0_2 = arith.constant 0 : index
    %c0_3 = arith.constant 0 : index
    %3 = vector.load %arg2[%c0_2, %c0_3] : memref<4x32xbf16, #tpu.memory_space<vmem>>, vector<4x32xbf16>
    %cst = arith.constant dense<0.000000e+00> : vector<16x32xf32>
    %4 = tpu.matmul %2, %3, %cst {dimension_numbers = #tpu.dot_dimension_numbers<[1], [0], [0], [1], [0, 0, 1, 1], [], []>} : vector<16x4xbf16>, vector<4x32xbf16>, vector<16x32xf32> -> vector<16x32xf32>
    %c0_4 = arith.constant 0 : index
    %c0_5 = arith.constant 0 : index
    %5 = vector.load %arg3[%c0_4, %c0_5] : memref<1x32xf32, #tpu.memory_space<vmem>>, vector<1x32xf32>
    %6 = vector.broadcast %5 : vector<1x32xf32> to vector<16x32xf32>
    %7 = arith.addf %4, %6 : vector<16x32xf32>
    %c0_6 = arith.constant 0 : index
    %c0_7 = arith.constant 0 : index
    %c0_8 = arith.constant 0 : index
    %8 = vector.load %arg4[%c0_6, %c0_7, %c0_8] : memref<2x1x32xf32, #tpu.memory_space<vmem>>, vector<1x1x32xf32>
    %9 = vector.shape_cast %8 : vector<1x1x32xf32> to vector<1x32xf32>
    %c0_9 = arith.constant 0 : index
    %c0_10 = arith.constant 0 : index
    %c0_11 = arith.constant 0 : index
    %10 = vector.load %arg5[%c0_9, %c0_10, %c0_11] : memref<2x1x32xf32, #tpu.memory_space<vmem>>, vector<1x1x32xf32>
    %11 = vector.shape_cast %10 : vector<1x1x32xf32> to vector<1x32xf32>
    %cst_12 = arith.constant dense<0.000000e+00> : vector<16xf32>
    %12 = vector.multi_reduction <add>, %7, %cst_12 [1] : vector<16x32xf32> to vector<16xf32>
    %13 = vector.shape_cast %12 : vector<16xf32> to vector<16x1xf32>
    %cst_13 = arith.constant 3.200000e+01 : f32
    %14 = vector.broadcast %cst_13 : f32 to vector<16x1xf32>
    %15 = arith.divf %13, %14 : vector<16x1xf32>
    %16 = vector.broadcast %15 : vector<16x1xf32> to vector<16x32xf32>
    %17 = arith.subf %7, %16 : vector<16x32xf32>
    %18 = arith.mulf %17, %17 : vector<16x32xf32>
    %cst_14 = arith.constant dense<0.000000e+00> : vector<16xf32>
    %19 = vector.multi_reduction <add>, %18, %cst_14 [1] : vector<16x32xf32> to vector<16xf32>
    %20 = vector.shape_cast %19 : vector<16xf32> to vector<16x1xf32>
    %cst_15 = arith.constant 3.200000e+01 : f32
    %21 = vector.broadcast %cst_15 : f32 to vector<16x1xf32>
    %22 = arith.divf %20, %21 : vector<16x1xf32>
    %23 = vector.broadcast %15 : vector<16x1xf32> to vector<16x32xf32>
    %24 = arith.subf %7, %23 : vector<16x32xf32>
    %cst_16 = arith.constant 9.99999974E-6 : f32
    %25 = vector.broadcast %cst_16 : f32 to vector<16x1xf32>
    %26 = arith.addf %22, %25 : vector<16x1xf32>
    %27 = math.rsqrt %26 : vector<16x1xf32>
    %28 = vector.broadcast %27 : vector<16x1xf32> to vector<16x32xf32>
    %29 = arith.mulf %24, %28 : vector<16x32xf32>
    %30 = vector.broadcast %9 : vector<1x32xf32> to vector<16x32xf32>
    %31 = arith.mulf %29, %30 : vector<16x32xf32>
    %32 = vector.broadcast %11 : vector<1x32xf32> to vector<16x32xf32>
    %33 = arith.addf %31, %32 : vector<16x32xf32>
    %34 = arith.truncf %33 : vector<16x32xf32> to vector<16x32xbf16>
    %c0_17 = arith.constant 0 : index
    %c0_18 = arith.constant 0 : index
    %c0_19 = arith.constant 0 : index
    %35 = vector.load %arg6[%c0_17, %c0_18, %c0_19] : memref<2x32x64xbf16, #tpu.memory_space<vmem>>, vector<1x32x64xbf16>
    %36 = vector.shape_cast %35 : vector<1x32x64xbf16> to vector<32x64xbf16>
    %cst_20 = arith.constant dense<0.000000e+00> : vector<16x64xf32>
    %37 = tpu.matmul %34, %36, %cst_20 {dimension_numbers = #tpu.dot_dimension_numbers<[1], [0], [0], [1], [0, 0, 1, 1], [], []>} : vector<16x32xbf16>, vector<32x64xbf16>, vector<16x64xf32> -> vector<16x64xf32>
    %c0_21 = arith.constant 0 : index
    %c0_22 = arith.constant 0 : index
    %c0_23 = arith.constant 0 : index
    %38 = vector.load %arg7[%c0_21, %c0_22, %c0_23] : memref<2x1x64xf32, #tpu.memory_space<vmem>>, vector<1x1x64xf32>
    %39 = vector.shape_cast %38 : vector<1x1x64xf32> to vector<1x64xf32>
    %40 = vector.broadcast %39 : vector<1x64xf32> to vector<16x64xf32>
    %41 = arith.addf %37, %40 : vector<16x64xf32>
    %42 = arith.mulf %41, %41 : vector<16x64xf32>
    %43 = arith.mulf %41, %42 : vector<16x64xf32>
    %cst_24 = arith.constant 4.471500e-02 : f32
    %44 = vector.broadcast %cst_24 : f32 to vector<16x64xf32>
    %45 = arith.mulf %44, %43 : vector<16x64xf32>
    %46 = arith.addf %41, %45 : vector<16x64xf32>
    %cst_25 = arith.constant 0.797884583 : f32
    %47 = vector.broadcast %cst_25 : f32 to vector<16x64xf32>
    %48 = arith.mulf %47, %46 : vector<16x64xf32>
    %49 = math.tanh %48 : vector<16x64xf32>
    %cst_26 = arith.constant 1.000000e+00 : f32
    %50 = vector.broadcast %cst_26 : f32 to vector<16x64xf32>
    %51 = arith.addf %50, %49 : vector<16x64xf32>
    %cst_27 = arith.constant 5.000000e-01 : f32
    %52 = vector.broadcast %cst_27 : f32 to vector<16x64xf32>
    %53 = arith.mulf %52, %51 : vector<16x64xf32>
    %54 = arith.mulf %41, %53 : vector<16x64xf32>
    %c0_28 = arith.constant 0 : index
    %c0_29 = arith.constant 0 : index
    %c0_30 = arith.constant 0 : index
    %55 = vector.load %arg8[%c0_28, %c0_29, %c0_30] : memref<2x32x64xbf16, #tpu.memory_space<vmem>>, vector<1x32x64xbf16>
    %56 = vector.shape_cast %55 : vector<1x32x64xbf16> to vector<32x64xbf16>
    %cst_31 = arith.constant dense<0.000000e+00> : vector<16x64xf32>
    %57 = tpu.matmul %34, %56, %cst_31 {dimension_numbers = #tpu.dot_dimension_numbers<[1], [0], [0], [1], [0, 0, 1, 1], [], []>} : vector<16x32xbf16>, vector<32x64xbf16>, vector<16x64xf32> -> vector<16x64xf32>
    %c0_32 = arith.constant 0 : index
    %c0_33 = arith.constant 0 : index
    %c0_34 = arith.constant 0 : index
    %58 = vector.load %arg9[%c0_32, %c0_33, %c0_34] : memref<2x1x64xf32, #tpu.memory_space<vmem>>, vector<1x1x64xf32>
    %59 = vector.shape_cast %58 : vector<1x1x64xf32> to vector<1x64xf32>
    %60 = vector.broadcast %59 : vector<1x64xf32> to vector<16x64xf32>
    %61 = arith.addf %57, %60 : vector<16x64xf32>
    %62 = arith.mulf %61, %61 : vector<16x64xf32>
    %63 = arith.mulf %61, %62 : vector<16x64xf32>
    %cst_35 = arith.constant 4.471500e-02 : f32
    %64 = vector.broadcast %cst_35 : f32 to vector<16x64xf32>
    %65 = arith.mulf %64, %63 : vector<16x64xf32>
    %66 = arith.addf %61, %65 : vector<16x64xf32>
    %cst_36 = arith.constant 0.797884583 : f32
    %67 = vector.broadcast %cst_36 : f32 to vector<16x64xf32>
    %68 = arith.mulf %67, %66 : vector<16x64xf32>
    %69 = math.tanh %68 : vector<16x64xf32>
    %cst_37 = arith.constant 1.000000e+00 : f32
    %70 = vector.broadcast %cst_37 : f32 to vector<16x64xf32>
    %71 = arith.addf %70, %69 : vector<16x64xf32>
    %cst_38 = arith.constant 5.000000e-01 : f32
    %72 = vector.broadcast %cst_38 : f32 to vector<16x64xf32>
    %73 = arith.mulf %72, %71 : vector<16x64xf32>
    %74 = arith.mulf %61, %73 : vector<16x64xf32>
    %c0_39 = arith.constant 0 : index
    %c0_40 = arith.constant 0 : index
    %c0_41 = arith.constant 0 : index
    %75 = vector.load %arg10[%c0_39, %c0_40, %c0_41] : memref<2x1x64xf32, #tpu.memory_space<vmem>>, vector<1x1x64xf32>
    %76 = vector.shape_cast %75 : vector<1x1x64xf32> to vector<1x64xf32>
    %c0_42 = arith.constant 0 : index
    %c0_43 = arith.constant 0 : index
    %c0_44 = arith.constant 0 : index
    %77 = vector.load %arg11[%c0_42, %c0_43, %c0_44] : memref<2x1x64xf32, #tpu.memory_space<vmem>>, vector<1x1x64xf32>
    %78 = vector.shape_cast %77 : vector<1x1x64xf32> to vector<1x64xf32>
    %cst_45 = arith.constant dense<0.000000e+00> : vector<16xf32>
    %79 = vector.multi_reduction <add>, %74, %cst_45 [1] : vector<16x64xf32> to vector<16xf32>
    %80 = vector.shape_cast %79 : vector<16xf32> to vector<16x1xf32>
    %cst_46 = arith.constant 6.400000e+01 : f32
    %81 = vector.broadcast %cst_46 : f32 to vector<16x1xf32>
    %82 = arith.divf %80, %81 : vector<16x1xf32>
    %83 = vector.broadcast %82 : vector<16x1xf32> to vector<16x64xf32>
    %84 = arith.subf %74, %83 : vector<16x64xf32>
    %85 = arith.mulf %84, %84 : vector<16x64xf32>
    %cst_47 = arith.constant dense<0.000000e+00> : vector<16xf32>
    %86 = vector.multi_reduction <add>, %85, %cst_47 [1] : vector<16x64xf32> to vector<16xf32>
    %87 = vector.shape_cast %86 : vector<16xf32> to vector<16x1xf32>
    %cst_48 = arith.constant 6.400000e+01 : f32
    %88 = vector.broadcast %cst_48 : f32 to vector<16x1xf32>
    %89 = arith.divf %87, %88 : vector<16x1xf32>
    %90 = vector.broadcast %82 : vector<16x1xf32> to vector<16x64xf32>
    %91 = arith.subf %74, %90 : vector<16x64xf32>
    %cst_49 = arith.constant 9.99999974E-6 : f32
    %92 = vector.broadcast %cst_49 : f32 to vector<16x1xf32>
    %93 = arith.addf %89, %92 : vector<16x1xf32>
    %94 = math.rsqrt %93 : vector<16x1xf32>
    %95 = vector.broadcast %94 : vector<16x1xf32> to vector<16x64xf32>
    %96 = arith.mulf %91, %95 : vector<16x64xf32>
    %97 = vector.broadcast %76 : vector<1x64xf32> to vector<16x64xf32>
    %98 = arith.mulf %96, %97 : vector<16x64xf32>
    %99 = vector.broadcast %78 : vector<1x64xf32> to vector<16x64xf32>
    %100 = arith.addf %98, %99 : vector<16x64xf32>
    %c0_50 = arith.constant 0 : index
    %c0_51 = arith.constant 0 : index
    %c0_52 = arith.constant 0 : index
    %101 = vector.load %arg12[%c0_50, %c0_51, %c0_52] : memref<2x8x8xf32, #tpu.memory_space<vmem>>, vector<1x8x8xf32>
    %102 = vector.shape_cast %101 : vector<1x8x8xf32> to vector<8x8xf32>
    %c0_53 = arith.constant 0 : index
    %c0_54 = arith.constant 0 : index
    %c0_55 = arith.constant 0 : index
    %103 = vector.load %arg13[%c0_53, %c0_54, %c0_55] : memref<2x8x64xf32, #tpu.memory_space<vmem>>, vector<1x8x64xf32>
    %104 = vector.shape_cast %103 : vector<1x8x64xf32> to vector<8x64xf32>
    %105 = vector.extract_strided_slice %100 {offsets = [0, 0], sizes = [8, 64], strides = [1, 1]} : vector<16x64xf32> to vector<8x64xf32>
    %cst_56 = arith.constant dense<0.000000e+00> : vector<8x64xf32>
    %106 = tpu.matmul %102, %105, %cst_56 {dimension_numbers = #tpu.dot_dimension_numbers<[1], [0], [0], [1], [0, 0, 1, 1], [], []>} : vector<8x8xf32>, vector<8x64xf32>, vector<8x64xf32> -> vector<8x64xf32>
    %107 = arith.addf %106, %104 : vector<8x64xf32>
    %108 = vector.extract_strided_slice %100 {offsets = [8, 0], sizes = [8, 64], strides = [1, 1]} : vector<16x64xf32> to vector<8x64xf32>
    %cst_57 = arith.constant dense<0.000000e+00> : vector<8x64xf32>
    %109 = tpu.matmul %102, %108, %cst_57 {dimension_numbers = #tpu.dot_dimension_numbers<[1], [0], [0], [1], [0, 0, 1, 1], [], []>} : vector<8x8xf32>, vector<8x64xf32>, vector<8x64xf32> -> vector<8x64xf32>
    %110 = arith.addf %109, %104 : vector<8x64xf32>
    %111 = tpu.concatenate %107, %110 in 0 : vector<8x64xf32>, vector<8x64xf32> -> vector<16x64xf32>
    %112 = arith.mulf %111, %54 : vector<16x64xf32>
    %113 = arith.truncf %112 : vector<16x64xf32> to vector<16x64xbf16>
    %c0_58 = arith.constant 0 : index
    %c0_59 = arith.constant 0 : index
    %c0_60 = arith.constant 0 : index
    %114 = vector.load %arg14[%c0_58, %c0_59, %c0_60] : memref<2x64x32xbf16, #tpu.memory_space<vmem>>, vector<1x64x32xbf16>
    %115 = vector.shape_cast %114 : vector<1x64x32xbf16> to vector<64x32xbf16>
    %cst_61 = arith.constant dense<0.000000e+00> : vector<16x32xf32>
    %116 = tpu.matmul %113, %115, %cst_61 {dimension_numbers = #tpu.dot_dimension_numbers<[1], [0], [0], [1], [0, 0, 1, 1], [], []>} : vector<16x64xbf16>, vector<64x32xbf16>, vector<16x32xf32> -> vector<16x32xf32>
    %c0_62 = arith.constant 0 : index
    %c0_63 = arith.constant 0 : index
    %c0_64 = arith.constant 0 : index
    %117 = vector.load %arg15[%c0_62, %c0_63, %c0_64] : memref<2x1x32xf32, #tpu.memory_space<vmem>>, vector<1x1x32xf32>
    %118 = vector.shape_cast %117 : vector<1x1x32xf32> to vector<1x32xf32>
    %119 = vector.broadcast %118 : vector<1x32xf32> to vector<16x32xf32>
    %120 = arith.addf %116, %119 : vector<16x32xf32>
    %121 = arith.addf %120, %7 : vector<16x32xf32>
    %c1 = arith.constant 1 : index
    %c0_65 = arith.constant 0 : index
    %c0_66 = arith.constant 0 : index
    %122 = vector.load %arg4[%c1, %c0_65, %c0_66] : memref<2x1x32xf32, #tpu.memory_space<vmem>>, vector<1x1x32xf32>
    %123 = vector.shape_cast %122 : vector<1x1x32xf32> to vector<1x32xf32>
    %c1_67 = arith.constant 1 : index
    %c0_68 = arith.constant 0 : index
    %c0_69 = arith.constant 0 : index
    %124 = vector.load %arg5[%c1_67, %c0_68, %c0_69] : memref<2x1x32xf32, #tpu.memory_space<vmem>>, vector<1x1x32xf32>
    %125 = vector.shape_cast %124 : vector<1x1x32xf32> to vector<1x32xf32>
    %cst_70 = arith.constant dense<0.000000e+00> : vector<16xf32>
    %126 = vector.multi_reduction <add>, %121, %cst_70 [1] : vector<16x32xf32> to vector<16xf32>
    %127 = vector.shape_cast %126 : vector<16xf32> to vector<16x1xf32>
    %cst_71 = arith.constant 3.200000e+01 : f32
    %128 = vector.broadcast %cst_71 : f32 to vector<16x1xf32>
    %129 = arith.divf %127, %128 : vector<16x1xf32>
    %130 = vector.broadcast %129 : vector<16x1xf32> to vector<16x32xf32>
    %131 = arith.subf %121, %130 : vector<16x32xf32>
    %132 = arith.mulf %131, %131 : vector<16x32xf32>
    %cst_72 = arith.constant dense<0.000000e+00> : vector<16xf32>
    %133 = vector.multi_reduction <add>, %132, %cst_72 [1] : vector<16x32xf32> to vector<16xf32>
    %134 = vector.shape_cast %133 : vector<16xf32> to vector<16x1xf32>
    %cst_73 = arith.constant 3.200000e+01 : f32
    %135 = vector.broadcast %cst_73 : f32 to vector<16x1xf32>
    %136 = arith.divf %134, %135 : vector<16x1xf32>
    %137 = vector.broadcast %129 : vector<16x1xf32> to vector<16x32xf32>
    %138 = arith.subf %121, %137 : vector<16x32xf32>
    %cst_74 = arith.constant 9.99999974E-6 : f32
    %139 = vector.broadcast %cst_74 : f32 to vector<16x1xf32>
    %140 = arith.addf %136, %139 : vector<16x1xf32>
    %141 = math.rsqrt %140 : vector<16x1xf32>
    %142 = vector.broadcast %141 : vector<16x1xf32> to vector<16x32xf32>
    %143 = arith.mulf %138, %142 : vector<16x32xf32>
    %144 = vector.broadcast %123 : vector<1x32xf32> to vector<16x32xf32>
    %145 = arith.mulf %143, %144 : vector<16x32xf32>
    %146 = vector.broadcast %125 : vector<1x32xf32> to vector<16x32xf32>
    %147 = arith.addf %145, %146 : vector<16x32xf32>
    %148 = arith.truncf %147 : vector<16x32xf32> to vector<16x32xbf16>
    %c1_75 = arith.constant 1 : index
    %c0_76 = arith.constant 0 : index
    %c0_77 = arith.constant 0 : index
    %149 = vector.load %arg6[%c1_75, %c0_76, %c0_77] : memref<2x32x64xbf16, #tpu.memory_space<vmem>>, vector<1x32x64xbf16>
    %150 = vector.shape_cast %149 : vector<1x32x64xbf16> to vector<32x64xbf16>
    %cst_78 = arith.constant dense<0.000000e+00> : vector<16x64xf32>
    %151 = tpu.matmul %148, %150, %cst_78 {dimension_numbers = #tpu.dot_dimension_numbers<[1], [0], [0], [1], [0, 0, 1, 1], [], []>} : vector<16x32xbf16>, vector<32x64xbf16>, vector<16x64xf32> -> vector<16x64xf32>
    %c1_79 = arith.constant 1 : index
    %c0_80 = arith.constant 0 : index
    %c0_81 = arith.constant 0 : index
    %152 = vector.load %arg7[%c1_79, %c0_80, %c0_81] : memref<2x1x64xf32, #tpu.memory_space<vmem>>, vector<1x1x64xf32>
    %153 = vector.shape_cast %152 : vector<1x1x64xf32> to vector<1x64xf32>
    %154 = vector.broadcast %153 : vector<1x64xf32> to vector<16x64xf32>
    %155 = arith.addf %151, %154 : vector<16x64xf32>
    %156 = arith.mulf %155, %155 : vector<16x64xf32>
    %157 = arith.mulf %155, %156 : vector<16x64xf32>
    %cst_82 = arith.constant 4.471500e-02 : f32
    %158 = vector.broadcast %cst_82 : f32 to vector<16x64xf32>
    %159 = arith.mulf %158, %157 : vector<16x64xf32>
    %160 = arith.addf %155, %159 : vector<16x64xf32>
    %cst_83 = arith.constant 0.797884583 : f32
    %161 = vector.broadcast %cst_83 : f32 to vector<16x64xf32>
    %162 = arith.mulf %161, %160 : vector<16x64xf32>
    %163 = math.tanh %162 : vector<16x64xf32>
    %cst_84 = arith.constant 1.000000e+00 : f32
    %164 = vector.broadcast %cst_84 : f32 to vector<16x64xf32>
    %165 = arith.addf %164, %163 : vector<16x64xf32>
    %cst_85 = arith.constant 5.000000e-01 : f32
    %166 = vector.broadcast %cst_85 : f32 to vector<16x64xf32>
    %167 = arith.mulf %166, %165 : vector<16x64xf32>
    %168 = arith.mulf %155, %167 : vector<16x64xf32>
    %c1_86 = arith.constant 1 : index
    %c0_87 = arith.constant 0 : index
    %c0_88 = arith.constant 0 : index
    %169 = vector.load %arg8[%c1_86, %c0_87, %c0_88] : memref<2x32x64xbf16, #tpu.memory_space<vmem>>, vector<1x32x64xbf16>
    %170 = vector.shape_cast %169 : vector<1x32x64xbf16> to vector<32x64xbf16>
    %cst_89 = arith.constant dense<0.000000e+00> : vector<16x64xf32>
    %171 = tpu.matmul %148, %170, %cst_89 {dimension_numbers = #tpu.dot_dimension_numbers<[1], [0], [0], [1], [0, 0, 1, 1], [], []>} : vector<16x32xbf16>, vector<32x64xbf16>, vector<16x64xf32> -> vector<16x64xf32>
    %c1_90 = arith.constant 1 : index
    %c0_91 = arith.constant 0 : index
    %c0_92 = arith.constant 0 : index
    %172 = vector.load %arg9[%c1_90, %c0_91, %c0_92] : memref<2x1x64xf32, #tpu.memory_space<vmem>>, vector<1x1x64xf32>
    %173 = vector.shape_cast %172 : vector<1x1x64xf32> to vector<1x64xf32>
    %174 = vector.broadcast %173 : vector<1x64xf32> to vector<16x64xf32>
    %175 = arith.addf %171, %174 : vector<16x64xf32>
    %176 = arith.mulf %175, %175 : vector<16x64xf32>
    %177 = arith.mulf %175, %176 : vector<16x64xf32>
    %cst_93 = arith.constant 4.471500e-02 : f32
    %178 = vector.broadcast %cst_93 : f32 to vector<16x64xf32>
    %179 = arith.mulf %178, %177 : vector<16x64xf32>
    %180 = arith.addf %175, %179 : vector<16x64xf32>
    %cst_94 = arith.constant 0.797884583 : f32
    %181 = vector.broadcast %cst_94 : f32 to vector<16x64xf32>
    %182 = arith.mulf %181, %180 : vector<16x64xf32>
    %183 = math.tanh %182 : vector<16x64xf32>
    %cst_95 = arith.constant 1.000000e+00 : f32
    %184 = vector.broadcast %cst_95 : f32 to vector<16x64xf32>
    %185 = arith.addf %184, %183 : vector<16x64xf32>
    %cst_96 = arith.constant 5.000000e-01 : f32
    %186 = vector.broadcast %cst_96 : f32 to vector<16x64xf32>
    %187 = arith.mulf %186, %185 : vector<16x64xf32>
    %188 = arith.mulf %175, %187 : vector<16x64xf32>
    %c1_97 = arith.constant 1 : index
    %c0_98 = arith.constant 0 : index
    %c0_99 = arith.constant 0 : index
    %189 = vector.load %arg10[%c1_97, %c0_98, %c0_99] : memref<2x1x64xf32, #tpu.memory_space<vmem>>, vector<1x1x64xf32>
    %190 = vector.shape_cast %189 : vector<1x1x64xf32> to vector<1x64xf32>
    %c1_100 = arith.constant 1 : index
    %c0_101 = arith.constant 0 : index
    %c0_102 = arith.constant 0 : index
    %191 = vector.load %arg11[%c1_100, %c0_101, %c0_102] : memref<2x1x64xf32, #tpu.memory_space<vmem>>, vector<1x1x64xf32>
    %192 = vector.shape_cast %191 : vector<1x1x64xf32> to vector<1x64xf32>
    %cst_103 = arith.constant dense<0.000000e+00> : vector<16xf32>
    %193 = vector.multi_reduction <add>, %188, %cst_103 [1] : vector<16x64xf32> to vector<16xf32>
    %194 = vector.shape_cast %193 : vector<16xf32> to vector<16x1xf32>
    %cst_104 = arith.constant 6.400000e+01 : f32
    %195 = vector.broadcast %cst_104 : f32 to vector<16x1xf32>
    %196 = arith.divf %194, %195 : vector<16x1xf32>
    %197 = vector.broadcast %196 : vector<16x1xf32> to vector<16x64xf32>
    %198 = arith.subf %188, %197 : vector<16x64xf32>
    %199 = arith.mulf %198, %198 : vector<16x64xf32>
    %cst_105 = arith.constant dense<0.000000e+00> : vector<16xf32>
    %200 = vector.multi_reduction <add>, %199, %cst_105 [1] : vector<16x64xf32> to vector<16xf32>
    %201 = vector.shape_cast %200 : vector<16xf32> to vector<16x1xf32>
    %cst_106 = arith.constant 6.400000e+01 : f32
    %202 = vector.broadcast %cst_106 : f32 to vector<16x1xf32>
    %203 = arith.divf %201, %202 : vector<16x1xf32>
    %204 = vector.broadcast %196 : vector<16x1xf32> to vector<16x64xf32>
    %205 = arith.subf %188, %204 : vector<16x64xf32>
    %cst_107 = arith.constant 9.99999974E-6 : f32
    %206 = vector.broadcast %cst_107 : f32 to vector<16x1xf32>
    %207 = arith.addf %203, %206 : vector<16x1xf32>
    %208 = math.rsqrt %207 : vector<16x1xf32>
    %209 = vector.broadcast %208 : vector<16x1xf32> to vector<16x64xf32>
    %210 = arith.mulf %205, %209 : vector<16x64xf32>
    %211 = vector.broadcast %190 : vector<1x64xf32> to vector<16x64xf32>
    %212 = arith.mulf %210, %211 : vector<16x64xf32>
    %213 = vector.broadcast %192 : vector<1x64xf32> to vector<16x64xf32>
    %214 = arith.addf %212, %213 : vector<16x64xf32>
    %c1_108 = arith.constant 1 : index
    %c0_109 = arith.constant 0 : index
    %c0_110 = arith.constant 0 : index
    %215 = vector.load %arg12[%c1_108, %c0_109, %c0_110] : memref<2x8x8xf32, #tpu.memory_space<vmem>>, vector<1x8x8xf32>
    %216 = vector.shape_cast %215 : vector<1x8x8xf32> to vector<8x8xf32>
    %c1_111 = arith.constant 1 : index
    %c0_112 = arith.constant 0 : index
    %c0_113 = arith.constant 0 : index
    %217 = vector.load %arg13[%c1_111, %c0_112, %c0_113] : memref<2x8x64xf32, #tpu.memory_space<vmem>>, vector<1x8x64xf32>
    %218 = vector.shape_cast %217 : vector<1x8x64xf32> to vector<8x64xf32>
    %219 = vector.extract_strided_slice %214 {offsets = [0, 0], sizes = [8, 64], strides = [1, 1]} : vector<16x64xf32> to vector<8x64xf32>
    %cst_114 = arith.constant dense<0.000000e+00> : vector<8x64xf32>
    %220 = tpu.matmul %216, %219, %cst_114 {dimension_numbers = #tpu.dot_dimension_numbers<[1], [0], [0], [1], [0, 0, 1, 1], [], []>} : vector<8x8xf32>, vector<8x64xf32>, vector<8x64xf32> -> vector<8x64xf32>
    %221 = arith.addf %220, %218 : vector<8x64xf32>
    %222 = vector.extract_strided_slice %214 {offsets = [8, 0], sizes = [8, 64], strides = [1, 1]} : vector<16x64xf32> to vector<8x64xf32>
    %cst_115 = arith.constant dense<0.000000e+00> : vector<8x64xf32>
    %223 = tpu.matmul %216, %222, %cst_115 {dimension_numbers = #tpu.dot_dimension_numbers<[1], [0], [0], [1], [0, 0, 1, 1], [], []>} : vector<8x8xf32>, vector<8x64xf32>, vector<8x64xf32> -> vector<8x64xf32>
    %224 = arith.addf %223, %218 : vector<8x64xf32>
    %225 = tpu.concatenate %221, %224 in 0 : vector<8x64xf32>, vector<8x64xf32> -> vector<16x64xf32>
    %226 = arith.mulf %225, %168 : vector<16x64xf32>
    %227 = arith.truncf %226 : vector<16x64xf32> to vector<16x64xbf16>
    %c1_116 = arith.constant 1 : index
    %c0_117 = arith.constant 0 : index
    %c0_118 = arith.constant 0 : index
    %228 = vector.load %arg14[%c1_116, %c0_117, %c0_118] : memref<2x64x32xbf16, #tpu.memory_space<vmem>>, vector<1x64x32xbf16>
    %229 = vector.shape_cast %228 : vector<1x64x32xbf16> to vector<64x32xbf16>
    %cst_119 = arith.constant dense<0.000000e+00> : vector<16x32xf32>
    %230 = tpu.matmul %227, %229, %cst_119 {dimension_numbers = #tpu.dot_dimension_numbers<[1], [0], [0], [1], [0, 0, 1, 1], [], []>} : vector<16x64xbf16>, vector<64x32xbf16>, vector<16x32xf32> -> vector<16x32xf32>
    %c1_120 = arith.constant 1 : index
    %c0_121 = arith.constant 0 : index
    %c0_122 = arith.constant 0 : index
    %231 = vector.load %arg15[%c1_120, %c0_121, %c0_122] : memref<2x1x32xf32, #tpu.memory_space<vmem>>, vector<1x1x32xf32>
    %232 = vector.shape_cast %231 : vector<1x1x32xf32> to vector<1x32xf32>
    %233 = vector.broadcast %232 : vector<1x32xf32> to vector<16x32xf32>
    %234 = arith.addf %230, %233 : vector<16x32xf32>
    %235 = arith.addf %234, %121 : vector<16x32xf32>
    %c0_123 = arith.constant 0 : index
    %c0_124 = arith.constant 0 : index
    %236 = vector.load %arg16[%c0_123, %c0_124] : memref<2x16xf32, #tpu.memory_space<vmem>>, vector<2x16xf32>
    %cst_125 = arith.constant dense<0.000000e+00> : vector<2x32xf32>
    %237 = tpu.matmul %236, %235, %cst_125 {dimension_numbers = #tpu.dot_dimension_numbers<[1], [0], [0], [1], [0, 0, 1, 1], [], []>} : vector<2x16xf32>, vector<16x32xf32>, vector<2x32xf32> -> vector<2x32xf32>
    %c0_126 = arith.constant 0 : index
    %c0_127 = arith.constant 0 : index
    %238 = vector.load %arg17[%c0_126, %c0_127] : memref<1x32xf32, #tpu.memory_space<vmem>>, vector<1x32xf32>
    %c0_128 = arith.constant 0 : index
    %c0_129 = arith.constant 0 : index
    %239 = vector.load %arg18[%c0_128, %c0_129] : memref<1x32xf32, #tpu.memory_space<vmem>>, vector<1x32xf32>
    %cst_130 = arith.constant dense<0.000000e+00> : vector<2xf32>
    %240 = vector.multi_reduction <add>, %237, %cst_130 [1] : vector<2x32xf32> to vector<2xf32>
    %241 = vector.shape_cast %240 : vector<2xf32> to vector<2x1xf32>
    %cst_131 = arith.constant 3.200000e+01 : f32
    %242 = vector.broadcast %cst_131 : f32 to vector<2x1xf32>
    %243 = arith.divf %241, %242 : vector<2x1xf32>
    %244 = vector.broadcast %243 : vector<2x1xf32> to vector<2x32xf32>
    %245 = arith.subf %237, %244 : vector<2x32xf32>
    %246 = arith.mulf %245, %245 : vector<2x32xf32>
    %cst_132 = arith.constant dense<0.000000e+00> : vector<2xf32>
    %247 = vector.multi_reduction <add>, %246, %cst_132 [1] : vector<2x32xf32> to vector<2xf32>
    %248 = vector.shape_cast %247 : vector<2xf32> to vector<2x1xf32>
    %cst_133 = arith.constant 3.200000e+01 : f32
    %249 = vector.broadcast %cst_133 : f32 to vector<2x1xf32>
    %250 = arith.divf %248, %249 : vector<2x1xf32>
    %251 = vector.broadcast %243 : vector<2x1xf32> to vector<2x32xf32>
    %252 = arith.subf %237, %251 : vector<2x32xf32>
    %cst_134 = arith.constant 9.99999974E-6 : f32
    %253 = vector.broadcast %cst_134 : f32 to vector<2x1xf32>
    %254 = arith.addf %250, %253 : vector<2x1xf32>
    %255 = math.rsqrt %254 : vector<2x1xf32>
    %256 = vector.broadcast %255 : vector<2x1xf32> to vector<2x32xf32>
    %257 = arith.mulf %252, %256 : vector<2x32xf32>
    %258 = vector.broadcast %238 : vector<1x32xf32> to vector<2x32xf32>
    %259 = arith.mulf %257, %258 : vector<2x32xf32>
    %260 = vector.broadcast %239 : vector<1x32xf32> to vector<2x32xf32>
    %261 = arith.addf %259, %260 : vector<2x32xf32>
    %262 = arith.truncf %261 : vector<2x32xf32> to vector<2x32xbf16>
    %c0_135 = arith.constant 0 : index
    %c0_136 = arith.constant 0 : index
    %263 = vector.load %arg19[%c0_135, %c0_136] : memref<32x128xbf16, #tpu.memory_space<vmem>>, vector<32x128xbf16>
    %cst_137 = arith.constant dense<0.000000e+00> : vector<2x128xf32>
    %264 = tpu.matmul %262, %263, %cst_137 {dimension_numbers = #tpu.dot_dimension_numbers<[1], [0], [0], [1], [0, 0, 1, 1], [], []>} : vector<2x32xbf16>, vector<32x128xbf16>, vector<2x128xf32> -> vector<2x128xf32>
    %c0_138 = arith.constant 0 : index
    %c0_139 = arith.constant 0 : index
    %265 = vector.load %arg20[%c0_138, %c0_139] : memref<1x128xf32, #tpu.memory_space<vmem>>, vector<1x128xf32>
    %266 = vector.broadcast %265 : vector<1x128xf32> to vector<2x128xf32>
    %267 = arith.addf %264, %266 : vector<2x128xf32>
    %c0_140 = arith.constant 0 : index
    %c0_141 = arith.constant 0 : index
    %c0_142 = arith.constant 0 : index
    %268 = vector.load %arg21[%c0_140, %c0_141, %c0_142] : memref<1x2x128xf32, #tpu.memory_space<vmem>>, vector<1x2x128xf32>
    %269 = vector.shape_cast %268 : vector<1x2x128xf32> to vector<2x128xf32>
    %270 = vector.shape_cast %267 : vector<2x128xf32> to vector<1x2x128xf32>
    tpu.vector_store %arg21[%c0_140, %c0_141, %c0_142], %270 {strides = array<i32>} : memref<1x2x128xf32, #tpu.memory_space<vmem>>, vector<1x2x128xf32>,
    return
  }
  func.func @transform_0(%arg0: i32) -> (i32, i32, i32) {
    %c0_i32 = arith.constant 0 : i32
    %c0_i32_0 = arith.constant 0 : i32
    %c0_i32_1 = arith.constant 0 : i32
    return %arg0, %c0_i32, %c0_i32_0 : i32, i32, i32
  }
  func.func @transform_1(%arg0: i32) -> (i32, i32) {
    %c0_i32 = arith.constant 0 : i32
    %c0_i32_0 = arith.constant 0 : i32
    %c0_i32_1 = arith.constant 0 : i32
    return %c0_i32, %c0_i32_0 : i32, i32
  }
  func.func @transform_2(%arg0: i32) -> (i32, i32) {
    %c0_i32 = arith.constant 0 : i32
    %c0_i32_0 = arith.constant 0 : i32
    %c0_i32_1 = arith.constant 0 : i32
    return %c0_i32, %c0_i32_0 : i32, i32
  }
  func.func @transform_3(%arg0: i32) -> (i32, i32, i32) {
    %c0_i32 = arith.constant 0 : i32
    %c0_i32_0 = arith.constant 0 : i32
    %c0_i32_1 = arith.constant 0 : i32
    %c0_i32_2 = arith.constant 0 : i32
    return %c0_i32, %c0_i32_0, %c0_i32_1 : i32, i32, i32
  }
  func.func @transform_4(%arg0: i32) -> (i32, i32, i32) {
    %c0_i32 = arith.constant 0 : i32
    %c0_i32_0 = arith.constant 0 : i32
    %c0_i32_1 = arith.constant 0 : i32
    %c0_i32_2 = arith.constant 0 : i32
    return %c0_i32, %c0_i32_0, %c0_i32_1 : i32, i32, i32
  }
  func.func @transform_5(%arg0: i32) -> (i32, i32, i32) {
    %c0_i32 = arith.constant 0 : i32
    %c0_i32_0 = arith.constant 0 : i32
    %c0_i32_1 = arith.constant 0 : i32
    %c0_i32_2 = arith.constant 0 : i32
    return %c0_i32, %c0_i32_0, %c0_i32_1 : i32, i32, i32
  }
  func.func @transform_6(%arg0: i32) -> (i32, i32, i32) {
    %c0_i32 = arith.constant 0 : i32
    %c0_i32_0 = arith.constant 0 : i32
    %c0_i32_1 = arith.constant 0 : i32
    %c0_i32_2 = arith.constant 0 : i32
    return %c0_i32, %c0_i32_0, %c0_i32_1 : i32, i32, i32
  }
  func.func @transform_7(%arg0: i32) -> (i32, i32, i32) {
    %c0_i32 = arith.constant 0 : i32
    %c0_i32_0 = arith.constant 0 : i32
    %c0_i32_1 = arith.constant 0 : i32
    %c0_i32_2 = arith.constant 0 : i32
    return %c0_i32, %c0_i32_0, %c0_i32_1 : i32, i32, i32
  }
  func.func @transform_8(%arg0: i32) -> (i32, i32, i32) {
    %c0_i32 = arith.constant 0 : i32
    %c0_i32_0 = arith.constant 0 : i32
    %c0_i32_1 = arith.constant 0 : i32
    %c0_i32_2 = arith.constant 0 : i32
    return %c0_i32, %c0_i32_0, %c0_i32_1 : i32, i32, i32
  }
  func.func @transform_9(%arg0: i32) -> (i32, i32, i32) {
    %c0_i32 = arith.constant 0 : i32
    %c0_i32_0 = arith.constant 0 : i32
    %c0_i32_1 = arith.constant 0 : i32
    %c0_i32_2 = arith.constant 0 : i32
    return %c0_i32, %c0_i32_0, %c0_i32_1 : i32, i32, i32
  }
  func.func @transform_10(%arg0: i32) -> (i32, i32, i32) {
    %c0_i32 = arith.constant 0 : i32
    %c0_i32_0 = arith.constant 0 : i32
    %c0_i32_1 = arith.constant 0 : i32
    %c0_i32_2 = arith.constant 0 : i32
    return %c0_i32, %c0_i32_0, %c0_i32_1 : i32, i32, i32
  }
  func.func @transform_11(%arg0: i32) -> (i32, i32, i32) {
    %c0_i32 = arith.constant 0 : i32
    %c0_i32_0 = arith.constant 0 : i32
    %c0_i32_1 = arith.constant 0 : i32
    %c0_i32_2 = arith.constant 0 : i32
    return %c0_i32, %c0_i32_0, %c0_i32_1 : i32, i32, i32
  }
  func.func @transform_12(%arg0: i32) -> (i32, i32, i32) {
    %c0_i32 = arith.constant 0 : i32
    %c0_i32_0 = arith.constant 0 : i32
    %c0_i32_1 = arith.constant 0 : i32
    %c0_i32_2 = arith.constant 0 : i32
    return %c0_i32, %c0_i32_0, %c0_i32_1 : i32, i32, i32
  }
  func.func @transform_13(%arg0: i32) -> (i32, i32, i32) {
    %c0_i32 = arith.constant 0 : i32
    %c0_i32_0 = arith.constant 0 : i32
    %c0_i32_1 = arith.constant 0 : i32
    %c0_i32_2 = arith.constant 0 : i32
    return %c0_i32, %c0_i32_0, %c0_i32_1 : i32, i32, i32
  }
  func.func @transform_14(%arg0: i32) -> (i32, i32, i32) {
    %c0_i32 = arith.constant 0 : i32
    %c0_i32_0 = arith.constant 0 : i32
    %c0_i32_1 = arith.constant 0 : i32
    %c0_i32_2 = arith.constant 0 : i32
    return %c0_i32, %c0_i32_0, %c0_i32_1 : i32, i32, i32
  }
  func.func @transform_15(%arg0: i32) -> (i32, i32) {
    %c0_i32 = arith.constant 0 : i32
    %c0_i32_0 = arith.constant 0 : i32
    %c0_i32_1 = arith.constant 0 : i32
    return %c0_i32, %c0_i32_0 : i32, i32
  }
  func.func @transform_16(%arg0: i32) -> (i32, i32) {
    %c0_i32 = arith.constant 0 : i32
    %c0_i32_0 = arith.constant 0 : i32
    %c0_i32_1 = arith.constant 0 : i32
    return %c0_i32, %c0_i32_0 : i32, i32
  }
  func.func @transform_17(%arg0: i32) -> (i32, i32) {
    %c0_i32 = arith.constant 0 : i32
    %c0_i32_0 = arith.constant 0 : i32
    %c0_i32_1 = arith.constant 0 : i32
    return %c0_i32, %c0_i32_0 : i32, i32
  }
  func.func @transform_18(%arg0: i32) -> (i32, i32) {
    %c0_i32 = arith.constant 0 : i32
    %c0_i32_0 = arith.constant 0 : i32
    %c0_i32_1 = arith.constant 0 : i32
    return %c0_i32, %c0_i32_0 : i32, i32
  }
  func.func @transform_19(%arg0: i32) -> (i32, i32) {
    %c0_i32 = arith.constant 0 : i32
    %c0_i32_0 = arith.constant 0 : i32
    %c0_i32_1 = arith.constant 0 : i32
    return %c0_i32, %c0_i32_0 : i32, i32
  }
  func.func @transform_20(%arg0: i32) -> (i32, i32, i32) {
    %c0_i32 = arith.constant 0 : i32
    %c0_i32_0 = arith.constant 0 : i32
    %c0_i32_1 = arith.constant 0 : i32
    return %arg0, %c0_i32, %c0_i32_0 : i32, i32, i32
  }
}

</mosaic_0001>

<llo_original>
// kernel: gmlp_forward.1
$region0: #{gmlp_forward.1}
  #allocation0 [shape = 'u32[]', space=smem, size = 0x4, offset = 0x4, fixed_abs, tag = 'smem constant byte address 0x4 - core index']
  #allocation1 [shape = 'u32[72,128]{1,0:T(1,128)}', space=vmem, size = 0x9000, scoped, tag = 'internal scratch']
  %s0 = inlined_call_operand.vmem [shape: f32[1,16,4], index: 0, kind: input, shape index: {}]
  %s1 = inlined_call_operand.vmem [shape: bf16[4,32], index: 1, kind: input, shape index: {}]
  %s2 = inlined_call_operand.vmem [shape: f32[1,32], index: 2, kind: input, shape index: {}]
  %s3 = inlined_call_operand.vmem [shape: f32[2,1,32], index: 3, kind: input, shape index: {}]
  %s4 = inlined_call_operand.vmem [shape: f32[2,1,32], index: 4, kind: input, shape index: {}]
  %s5 = inlined_call_operand.vmem [shape: bf16[2,32,64], index: 5, kind: input, shape index: {}]
  %s6 = inlined_call_operand.vmem [shape: f32[2,1,64], index: 6, kind: input, shape index: {}]
  %s7 = inlined_call_operand.vmem [shape: bf16[2,32,64], index: 7, kind: input, shape index: {}]
  %s8 = inlined_call_operand.vmem [shape: f32[2,1,64], index: 8, kind: input, shape index: {}]
  %s9 = inlined_call_operand.vmem [shape: f32[2,1,64], index: 9, kind: input, shape index: {}]
  %s10 = inlined_call_operand.vmem [shape: f32[2,1,64], index: 10, kind: input, shape index: {}]
  %s11 = inlined_call_operand.vmem [shape: f32[2,8,8], index: 11, kind: input, shape index: {}]
  %s12 = inlined_call_operand.vmem [shape: f32[2,8,64], index: 12, kind: input, shape index: {}]
  %s13 = inlined_call_operand.vmem [shape: bf16[2,64,32], index: 13, kind: input, shape index: {}]
  %s14 = inlined_call_operand.vmem [shape: f32[2,1,32], index: 14, kind: input, shape index: {}]
  %s15 = inlined_call_operand.vmem [shape: f32[2,16], index: 15, kind: input, shape index: {}]
  %s16 = inlined_call_operand.vmem [shape: f32[1,32], index: 16, kind: input, shape index: {}]
  %s17 = inlined_call_operand.vmem [shape: f32[1,32], index: 17, kind: input, shape index: {}]
  %s18 = inlined_call_operand.vmem [shape: bf16[32,128], index: 18, kind: input, shape index: {}]
  %s19 = inlined_call_operand.vmem [shape: f32[1,128], index: 19, kind: input, shape index: {}]
  %s20 = inlined_call_operand.hbm [shape: f32[1,2,128], index: 20, kind: output, shape index: {}]
  %s21 = sld [smem:[#allocation0]]
  $region90: #{gmlp_forward.1} parent=0
    _
  %s23 = ssub.s32 1, %s21
  %s24 = scalar_select 0, %s23, %s21
  $region1: #{gmlp_forward.1} parent=0
    #allocation2 [shape = 'u8[1024]{0}', space=vmem, size = 0x400, scoped, tag = 'output window, operand 0, single buffered']
    #allocation3 [shape = 's32[1]{0}', space=sflag, size = 0x4, scoped, tag = 'scoped memory for gmlp_forward.1']
    %25 = vsyncpa [#allocation3], 0
    // Predicated region
    $region2: #{gmlp_forward.1} parent=1 // pred_check
      _
    $region3: #{gmlp_forward.1} parent=1 // pred_check_branch
      %27 = sbr.rel (0) target = $region5
    $region4: #{gmlp_forward.1} parent=1 // pred_region
      _
    $region5: #{gmlp_forward.1} parent=1 // pred_fallthru
      _
    // Predicated region
    $region6: #{gmlp_forward.1} parent=1 // pred_check
      _
    $region7: #{gmlp_forward.1} parent=1 // pred_check_branch
      %29 = sbr.rel (0) target = $region9
    $region8: #{gmlp_forward.1} parent=1 // pred_region
      _
    $region9: #{gmlp_forward.1} parent=1 // pred_fallthru
      _
    // Predicated region
    $region10: #{gmlp_forward.1} parent=1 // pred_check
      _
    $region11: #{gmlp_forward.1} parent=1 // pred_check_branch
      %31 = sbr.rel (0) target = $region13
    $region12: #{gmlp_forward.1} parent=1 // pred_region
      _
    $region13: #{gmlp_forward.1} parent=1 // pred_fallthru
      _
    // Predicated region
    $region14: #{gmlp_forward.1} parent=1 // pred_check
      _
    $region15: #{gmlp_forward.1} parent=1 // pred_check_branch
      %33 = sbr.rel (0) target = $region17
    $region16: #{gmlp_forward.1} parent=1 // pred_region
      _
    $region17: #{gmlp_forward.1} parent=1 // pred_fallthru
      _
    // Predicated region
    $region18: #{gmlp_forward.1} parent=1 // pred_check
      _
    $region19: #{gmlp_forward.1} parent=1 // pred_check_branch
      %35 = sbr.rel (0) target = $region21
    $region20: #{gmlp_forward.1} parent=1 // pred_region
      _
    $region21: #{gmlp_forward.1} parent=1 // pred_fallthru
      _
    // Predicated region
    $region22: #{gmlp_forward.1} parent=1 // pred_check
      _
    $region23: #{gmlp_forward.1} parent=1 // pred_check_branch
      %37 = sbr.rel (0) target = $region25
    $region24: #{gmlp_forward.1} parent=1 // pred_region
      _
    $region25: #{gmlp_forward.1} parent=1 // pred_fallthru
      _
    // Predicated region
    $region26: #{gmlp_forward.1} parent=1 // pred_check
      _
    $region27: #{gmlp_forward.1} parent=1 // pred_check_branch
      %39 = sbr.rel (0) target = $region29
    $region28: #{gmlp_forward.1} parent=1 // pred_region
      _
    $region29: #{gmlp_forward.1} parent=1 // pred_fallthru
      _
    // Predicated region
    $region30: #{gmlp_forward.1} parent=1 // pred_check
      _
    $region31: #{gmlp_forward.1} parent=1 // pred_check_branch
      %41 = sbr.rel (0) target = $region33
    $region32: #{gmlp_forward.1} parent=1 // pred_region
      _
    $region33: #{gmlp_forward.1} parent=1 // pred_fallthru
      _
    // Predicated region
    $region34: #{gmlp_forward.1} parent=1 // pred_check
      _
    $region35: #{gmlp_forward.1} parent=1 // pred_check_branch
      %43 = sbr.rel (0) target = $region37
    $region36: #{gmlp_forward.1} parent=1 // pred_region
      _
    $region37: #{gmlp_forward.1} parent=1 // pred_fallthru
      _
    // Predicated region
    $region38: #{gmlp_forward.1} parent=1 // pred_check
      _
    $region39: #{gmlp_forward.1} parent=1 // pred_check_branch
      %45 = sbr.rel (0) target = $region41
    $region40: #{gmlp_forward.1} parent=1 // pred_region
      _
    $region41: #{gmlp_forward.1} parent=1 // pred_fallthru
      _
    // Predicated region
    $region42: #{gmlp_forward.1} parent=1 // pred_check
      _
    $region43: #{gmlp_forward.1} parent=1 // pred_check_branch
      %47 = sbr.rel (0) target = $region45
    $region44: #{gmlp_forward.1} parent=1 // pred_region
      _
    $region45: #{gmlp_forward.1} parent=1 // pred_fallthru
      _
    // Predicated region
    $region46: #{gmlp_forward.1} parent=1 // pred_check
      _
    $region47: #{gmlp_forward.1} parent=1 // pred_check_branch
      %49 = sbr.rel (0) target = $region49
    $region48: #{gmlp_forward.1} parent=1 // pred_region
      _
    $region49: #{gmlp_forward.1} parent=1 // pred_fallthru
      _
    // Predicated region
    $region50: #{gmlp_forward.1} parent=1 // pred_check
      _
    $region51: #{gmlp_forward.1} parent=1 // pred_check_branch
      %51 = sbr.rel (0) target = $region53
    $region52: #{gmlp_forward.1} parent=1 // pred_region
      _
    $region53: #{gmlp_forward.1} parent=1 // pred_fallthru
      _
    // Predicated region
    $region54: #{gmlp_forward.1} parent=1 // pred_check
      _
    $region55: #{gmlp_forward.1} parent=1 // pred_check_branch
      %53 = sbr.rel (0) target = $region57
    $region56: #{gmlp_forward.1} parent=1 // pred_region
      _
    $region57: #{gmlp_forward.1} parent=1 // pred_fallthru
      _
    // Predicated region
    $region58: #{gmlp_forward.1} parent=1 // pred_check
      _
    $region59: #{gmlp_forward.1} parent=1 // pred_check_branch
      %55 = sbr.rel (0) target = $region61
    $region60: #{gmlp_forward.1} parent=1 // pred_region
      _
    $region61: #{gmlp_forward.1} parent=1 // pred_fallthru
      _
    // Predicated region
    $region62: #{gmlp_forward.1} parent=1 // pred_check
      _
    $region63: #{gmlp_forward.1} parent=1 // pred_check_branch
      %57 = sbr.rel (0) target = $region65
    $region64: #{gmlp_forward.1} parent=1 // pred_region
      _
    $region65: #{gmlp_forward.1} parent=1 // pred_fallthru
      _
    // Predicated region
    $region66: #{gmlp_forward.1} parent=1 // pred_check
      _
    $region67: #{gmlp_forward.1} parent=1 // pred_check_branch
      %59 = sbr.rel (0) target = $region69
    $region68: #{gmlp_forward.1} parent=1 // pred_region
      _
    $region69: #{gmlp_forward.1} parent=1 // pred_fallthru
      _
    // Predicated region
    $region70: #{gmlp_forward.1} parent=1 // pred_check
      _
    $region71: #{gmlp_forward.1} parent=1 // pred_check_branch
      %61 = sbr.rel (0) target = $region73
    $region72: #{gmlp_forward.1} parent=1 // pred_region
      _
    $region73: #{gmlp_forward.1} parent=1 // pred_fallthru
      _
    // Predicated region
    $region74: #{gmlp_forward.1} parent=1 // pred_check
      _
    $region75: #{gmlp_forward.1} parent=1 // pred_check_branch
      %63 = sbr.rel (0) target = $region77
    $region76: #{gmlp_forward.1} parent=1 // pred_region
      _
    $region77: #{gmlp_forward.1} parent=1 // pred_fallthru
      _
    // Predicated region
    $region78: #{gmlp_forward.1} parent=1 // pred_check
      _
    $region79: #{gmlp_forward.1} parent=1 // pred_check_branch
      %65 = sbr.rel (0) target = $region81
    $region80: #{gmlp_forward.1} parent=1 // pred_region
      _
    $region81: #{gmlp_forward.1} parent=1 // pred_fallthru
      _
    %v67 = vld [vmem:[%s0] sm:$0xff]
    %v68 = vld [vmem:[%s0 + $0x8] sm:$0xff]
    %v69 = vpack.c.bf16 %v68, %v67
    %v70 = vld [vmem:[%s1] sm:$0x3]
    %v71 = vld [vmem:[%s2] sm:$0x1]
    %v73 = vperm.slane %v71, 0
    %vm75 = vcmask 31744
    %v77 = vsel %vm75, %v69, 0
    %vm79 = vcmask 1041408
    %v81 = vsel %vm79, %v70, 0
    %83 = vmatpush.bf16.msra.mxu0 0
    %84 = vmatpush.bf16.msra.mxu0 0
    %85 = vmatpush.bf16.msra.mxu0 0
    %86 = vmatpush.bf16.msra.mxu0 0
    %87 = vmatpush.bf16.msra.mxu0 0
    %88 = vmatpush.bf16.msra.mxu0 0
    %89 = vmatpush.bf16.msra.mxu0 0
    %90 = vmatpush.bf16.msra.mxu0 %v81
    %91 = vmatmul.bf16.gmra.mxu0 %v77
    %v92 = vpop.f32.mrf.mxu0
    %v93 = vadd.f32 %v73, %v92
    %v94 = vpop.f32.mrf.mxu0
    %v95 = vadd.f32 %v73, %v94
    %96 = vdwg.mxu0
    %v97 = vld [vmem:[%s3] sm:$0x1]
    %v98 = vld [vmem:[%s4] sm:$0x1]
    %vm99 = vcmask 261120
    %v100 = vsel %vm99, %v93, 0.0
    %101 = vadd.xlane.f32.xlu0 %v100
    %v102 = vpop.xlane.xlu0 %101
    %v103 = vsel %vm99, %v95, 0.0
    %104 = vadd.xlane.f32.xlu0 %v103
    %v105 = vpop.xlane.xlu0 %104
    %v106 = vrcp.pop 32.0
    %v107 = vmul.f32 32.0, %v106
    %v108 = vsub.f32 1.0, %v107
    %v109 = vmul.f32 %v106, %v108
    %v110 = vadd.f32 %v106, %v109
    %vm111 = vweird.f32 %v106
    %v112 = vsel %vm111, %v106, %v110
    %v113 = vmul.f32 %v102, %v112
    %v114 = vmul.f32 %v105, %v112
    %v115 = vsub.f32 %v93, %v113
    %v116 = vsub.f32 %v95, %v114
    %v117 = vmul.f32 %v115, %v115
    %v118 = vmul.f32 %v116, %v116
    %v119 = vsel %vm99, %v117, 0.0
    %120 = vadd.xlane.f32.xlu0 %v119
    %v121 = vpop.xlane.xlu0 %120
    %v122 = vsel %vm99, %v118, 0.0
    %123 = vadd.xlane.f32.xlu0 %v122
    %v124 = vpop.xlane.xlu0 %123
    %v125 = vmul.f32 %v121, %v112
    %v126 = vmul.f32 %v124, %v112
    %v127 = vadd.f32 %v125, 1e-05
    %v128 = vadd.f32 %v126, 1e-05
    %v129 = vrsqrt.pop %v127
    %v130 = vmul.f32 %v129, %v127
    %v131 = vmul.f32 %v130, %v129
    %v132 = vmul.f32 0.5, %v131
    %v133 = vsub.f32 1.5, %v132
    %v134 = vmul.f32 %v129, %v133
    %vm135 = vweird.f32 %v127
    %vm136 = vweird.f32 %v129
    %vm137 = vmor %vm135, %vm136
    %v138 = vsel %vm137, %v129, %v134
    %v139 = vrsqrt.pop %v128
    %v140 = vmul.f32 %v139, %v128
    %v141 = vmul.f32 %v140, %v139
    %v142 = vmul.f32 0.5, %v141
    %v143 = vsub.f32 1.5, %v142
    %v144 = vmul.f32 %v139, %v143
    %vm145 = vweird.f32 %v128
    %vm146 = vweird.f32 %v139
    %vm147 = vmor %vm145, %vm146
    %v148 = vsel %vm147, %v139, %v144
    %v149 = vmul.f32 %v115, %v138
    %v150 = vmul.f32 %v116, %v148
    %v152 = vperm.slane %v97, 0
    %v154 = vmul.f32 %v149, %v152
    %v155 = vmul.f32 %v150, %v152
    %v157 = vperm.slane %v98, 0
    %v159 = vadd.f32 %v154, %v157
    %v160 = vadd.f32 %v155, %v157
    %v161 = vpack.c.bf16 %v160, %v159
    %v162 = vld [vmem:[%s5] sm:$0xf]
    %v163 = vld [vmem:[%s5 + $0x4] sm:$0xf]
    %v164 = vld [vmem:[%s5 + $0x8] sm:$0xf]
    %v165 = vld [vmem:[%s5 + $0xc] sm:$0xf]
    %v166 = vld [vmem:[%s6] sm:$0x1]
    %v168 = vperm.slane %v166, 0
    %v174 = vunpack.c.l.b16 %v162
    %v175 = vunpack.c.l.b16 %v163
    %v176 = vunpack.c.l.b16 %v164
    %v177 = vunpack.c.l.b16 %v165
    %v178 = vpack.c.b16 %v175, %v174
    %v179 = vpack.c.b16 %v177, %v176
    %v183 = vsel %vm99, %v161, 0
    %185 = vmatpush.bf16.msra.mxu0 0
    %186 = vmatpush.bf16.msra.mxu0 0
    %187 = vmatpush.bf16.msra.mxu0 0
    %188 = vmatpush.bf16.msra.mxu0 0
    %189 = vmatpush.bf16.msra.mxu0 0
    %190 = vmatpush.bf16.msra.mxu0 0
    %191 = vmatpush.bf16.msra.mxu0 %v179
    %192 = vmatpush.bf16.msra.mxu0 %v178
    %193 = vmatmul.bf16.gmra.mxu0 %v183
    %v194 = vpop.f32.mrf.mxu0
    %v195 = vadd.f32 %v168, %v194
    %v196 = vpop.f32.mrf.mxu0
    %v197 = vadd.f32 %v168, %v196
    %198 = vdwg.mxu0
    %v199 = vmul.f32 %v195, %v195
    %v200 = vmul.f32 %v197, %v197
    %v201 = vmul.f32 %v195, %v199
    %v202 = vmul.f32 %v197, %v200
    %v203 = vmul.f32 %v201, 0.044715
    %v204 = vmul.f32 %v202, 0.044715
    %v205 = vadd.f32 %v195, %v203
    %v206 = vadd.f32 %v197, %v204
    %v207 = vmul.f32 %v205, 0.7978846
    %v208 = vmul.f32 %v206, 0.7978846
    %v209 = vtanh.pop %v207
    %v210 = vtanh.pop %v208
    %v211 = vadd.f32 %v209, 1.0
    %v212 = vadd.f32 %v210, 1.0
    %v213 = vmul.f32 %v211, 0.5
    %v214 = vmul.f32 %v212, 0.5
    %v215 = vmul.f32 %v195, %v213
    %v216 = vmul.f32 %v197, %v214
    %v217 = vld [vmem:[%s7] sm:$0xf]
    %v218 = vld [vmem:[%s7 + $0x4] sm:$0xf]
    %v219 = vld [vmem:[%s7 + $0x8] sm:$0xf]
    %v220 = vld [vmem:[%s7 + $0xc] sm:$0xf]
    %v221 = vld [vmem:[%s8] sm:$0x1]
    %v223 = vperm.slane %v221, 0
    %v229 = vunpack.c.l.b16 %v217
    %v230 = vunpack.c.l.b16 %v218
    %v231 = vunpack.c.l.b16 %v219
    %v232 = vunpack.c.l.b16 %v220
    %v233 = vpack.c.b16 %v230, %v229
    %v234 = vpack.c.b16 %v232, %v231
    %237 = vmatpush.bf16.msra.mxu0 0
    %238 = vmatpush.bf16.msra.mxu0 0
    %239 = vmatpush.bf16.msra.mxu0 0
    %240 = vmatpush.bf16.msra.mxu0 0
    %241 = vmatpush.bf16.msra.mxu0 0
    %242 = vmatpush.bf16.msra.mxu0 0
    %243 = vmatpush.bf16.msra.mxu0 %v234
    %244 = vmatpush.bf16.msra.mxu0 %v233
    %245 = vmatmul.bf16.gmra.mxu0 %v183
    %v246 = vpop.f32.mrf.mxu0
    %v247 = vadd.f32 %v223, %v246
    %v248 = vpop.f32.mrf.mxu0
    %v249 = vadd.f32 %v223, %v248
    %250 = vdwg.mxu0
    %v251 = vmul.f32 %v247, %v247
    %v252 = vmul.f32 %v249, %v249
    %v253 = vmul.f32 %v247, %v251
    %v254 = vmul.f32 %v249, %v252
    %v255 = vmul.f32 %v253, 0.044715
    %v256 = vmul.f32 %v254, 0.044715
    %v257 = vadd.f32 %v247, %v255
    %v258 = vadd.f32 %v249, %v256
    %v259 = vmul.f32 %v257, 0.7978846
    %v260 = vmul.f32 %v258, 0.7978846
    %v261 = vtanh.pop %v259
    %v262 = vtanh.pop %v260
    %v263 = vadd.f32 %v261, 1.0
    %v264 = vadd.f32 %v262, 1.0
    %v265 = vmul.f32 %v263, 0.5
    %v266 = vmul.f32 %v264, 0.5
    %v267 = vmul.f32 %v247, %v265
    %v268 = vmul.f32 %v249, %v266
    %v269 = vld [vmem:[%s9] sm:$0x1]
    %v270 = vld [vmem:[%s10] sm:$0x1]
    %vm271 = vcmask 523264
    %v272 = vsel %vm271, %v267, 0.0
    %273 = vadd.xlane.f32.xlu0 %v272
    %v274 = vpop.xlane.xlu0 %273
    %v275 = vsel %vm271, %v268, 0.0
    %276 = vadd.xlane.f32.xlu0 %v275
    %v277 = vpop.xlane.xlu0 %276
    %v278 = vrcp.pop 64.0
    %v279 = vmul.f32 64.0, %v278
    %v280 = vsub.f32 1.0, %v279
    %v281 = vmul.f32 %v278, %v280
    %v282 = vadd.f32 %v278, %v281
    %vm283 = vweird.f32 %v278
    %v284 = vsel %vm283, %v278, %v282
    %v285 = vmul.f32 %v274, %v284
    %v286 = vmul.f32 %v277, %v284
    %v287 = vsub.f32 %v267, %v285
    %v288 = vsub.f32 %v268, %v286
    %v289 = vmul.f32 %v287, %v287
    %v290 = vmul.f32 %v288, %v288
    %v291 = vsel %vm271, %v289, 0.0
    %292 = vadd.xlane.f32.xlu0 %v291
    %v293 = vpop.xlane.xlu0 %292
    %v294 = vsel %vm271, %v290, 0.0
    %295 = vadd.xlane.f32.xlu0 %v294
    %v296 = vpop.xlane.xlu0 %295
    %v297 = vmul.f32 %v293, %v284
    %v298 = vmul.f32 %v296, %v284
    %v299 = vadd.f32 %v297, 1e-05
    %v300 = vadd.f32 %v298, 1e-05
    %v301 = vrsqrt.pop %v299
    %v302 = vmul.f32 %v301, %v299
    %v303 = vmul.f32 %v302, %v301
    %v304 = vmul.f32 0.5, %v303
    %v305 = vsub.f32 1.5, %v304
    %v306 = vmul.f32 %v301, %v305
    %vm307 = vweird.f32 %v299
    %vm308 = vweird.f32 %v301
    %vm309 = vmor %vm307, %vm308
    %v310 = vsel %vm309, %v301, %v306
    %v311 = vrsqrt.pop %v300
    %v312 = vmul.f32 %v311, %v300
    %v313 = vmul.f32 %v312, %v311
    %v314 = vmul.f32 0.5, %v313
    %v315 = vsub.f32 1.5, %v314
    %v316 = vmul.f32 %v311, %v315
    %vm317 = vweird.f32 %v300
    %vm318 = vweird.f32 %v311
    %vm319 = vmor %vm317, %vm318
    %v320 = vsel %vm319, %v311, %v316
    %v321 = vmul.f32 %v287, %v310
    %v322 = vmul.f32 %v288, %v320
    %v324 = vperm.slane %v269, 0
    %v326 = vmul.f32 %v321, %v324
    %v327 = vmul.f32 %v322, %v324
    %v329 = vperm.slane %v270, 0
    %v331 = vadd.f32 %v326, %v329
    %v332 = vadd.f32 %v327, %v329
    %v333 = vld [vmem:[%s11] sm:$0xff]
    %v334 = vld [vmem:[%s12] sm:$0xff]
    %vm335 = vcmask 64512
    %v337 = vsel %vm335, %v333, 0
    %339 = vmatpush.msra.mxu0 0.0
    %340 = vmatpush.msra.mxu0 0.0
    %341 = vmatpush.msra.mxu0 0.0
    %342 = vmatpush.msra.mxu0 0.0
    %343 = vmatpush.msra.mxu0 0.0
    %344 = vmatpush.msra.mxu0 0.0
    %345 = vmatpush.msra.mxu0 0.0
    %346 = vmatpush.msra.mxu0 0.0
    %347 = vmatpush.msra.mxu0 0.0
    %348 = vmatpush.msra.mxu0 0.0
    %349 = vmatpush.msra.mxu0 0.0
    %350 = vmatpush.msra.mxu0 0.0
    %351 = vmatpush.msra.mxu0 0.0
    %352 = vmatpush.msra.mxu0 0.0
    %353 = vmatpush.msra.mxu0 0.0
    %354 = vmatpush.msra.mxu0 %v331
    %355 = vmatmul.f32.gmra.mxu0 %v337
    %v356 = vpop.f32.mrf.mxu0
    %v357 = vadd.f32 %v334, %v356
    %358 = vdwg.mxu0
    %359 = vmatpush.msra.mxu0 0.0
    %360 = vmatpush.msra.mxu0 0.0
    %361 = vmatpush.msra.mxu0 0.0
    %362 = vmatpush.msra.mxu0 0.0
    %363 = vmatpush.msra.mxu0 0.0
    %364 = vmatpush.msra.mxu0 0.0
    %365 = vmatpush.msra.mxu0 0.0
    %366 = vmatpush.msra.mxu0 0.0
    %367 = vmatpush.msra.mxu0 0.0
    %368 = vmatpush.msra.mxu0 0.0
    %369 = vmatpush.msra.mxu0 0.0
    %370 = vmatpush.msra.mxu0 0.0
    %371 = vmatpush.msra.mxu0 0.0
    %372 = vmatpush.msra.mxu0 0.0
    %373 = vmatpush.msra.mxu0 0.0
    %374 = vmatpush.msra.mxu0 %v332
    %375 = vmatmul.f32.gmra.mxu0 %v337
    %v376 = vpop.f32.mrf.mxu0
    %v377 = vadd.f32 %v334, %v376
    %378 = vdwg.mxu0
    %v379 = vmul.f32 %v357, %v215
    %v380 = vmul.f32 %v377, %v216
    %v381 = vpack.c.bf16 %v380, %v379
    %v382 = vld [vmem:[%s13] sm:$0xf]
    %v383 = vld [vmem:[%s13 + $0x4] sm:$0xf]
    %v384 = vld [vmem:[%s13 + $0x8] sm:$0xf]
    %v385 = vld [vmem:[%s13 + $0xc] sm:$0xf]
    %v386 = vld [vmem:[%s13 + $0x10] sm:$0xf]
    %v387 = vld [vmem:[%s13 + $0x14] sm:$0xf]
    %v388 = vld [vmem:[%s13 + $0x18] sm:$0xf]
    %v389 = vld [vmem:[%s13 + $0x1c] sm:$0xf]
    %v390 = vld [vmem:[%s14] sm:$0x1]
    %v392 = vperm.slane %v390, 0
    %v402 = vunpack.c.l.b16 %v382
    %v403 = vunpack.c.l.b16 %v383
    %v404 = vunpack.c.l.b16 %v384
    %v405 = vunpack.c.l.b16 %v385
    %v406 = vunpack.c.l.b16 %v386
    %v407 = vunpack.c.l.b16 %v387
    %v408 = vunpack.c.l.b16 %v388
    %v409 = vunpack.c.l.b16 %v389
    %v410 = vpack.c.b16 %v403, %v402
    %v411 = vpack.c.b16 %v405, %v404
    %v412 = vpack.c.b16 %v407, %v406
    %v413 = vpack.c.b16 %v409, %v408
    %v419 = vsel %vm271, %v381, 0
    %421 = vmatpush.bf16.msra.mxu0 0
    %422 = vmatpush.bf16.msra.mxu0 0
    %423 = vmatpush.bf16.msra.mxu0 0
    %424 = vmatpush.bf16.msra.mxu0 0
    %425 = vmatpush.bf16.msra.mxu0 %v413
    %426 = vmatpush.bf16.msra.mxu0 %v412
    %427 = vmatpush.bf16.msra.mxu0 %v411
    %428 = vmatpush.bf16.msra.mxu0 %v410
    %429 = vmatmul.bf16.gmra.mxu0 %v419
    %v430 = vpop.f32.mrf.mxu0
    %v431 = vadd.f32 %v392, %v430
    %v432 = vpop.f32.mrf.mxu0
    %v433 = vadd.f32 %v392, %v432
    %434 = vdwg.mxu0
    %v435 = vadd.f32 %v431, %v93
    %v436 = vadd.f32 %v433, %v95
    %s437 = scalar_lea.vmem %s3, 1
    %v438 = vld [vmem:[%s437] sm:$0x1]
    %s439 = scalar_lea.vmem %s4, 1
    %v440 = vld [vmem:[%s439] sm:$0x1]
    %v441 = vsel %vm99, %v435, 0.0
    %442 = vadd.xlane.f32.xlu0 %v441
    %v443 = vpop.xlane.xlu0 %442
    %v444 = vsel %vm99, %v436, 0.0
    %445 = vadd.xlane.f32.xlu0 %v444
    %v446 = vpop.xlane.xlu0 %445
    %v447 = vmul.f32 %v443, %v112
    %v448 = vmul.f32 %v446, %v112
    %v449 = vsub.f32 %v435, %v447
    %v450 = vsub.f32 %v436, %v448
    %v451 = vmul.f32 %v449, %v449
    %v452 = vmul.f32 %v450, %v450
    %v453 = vsel %vm99, %v451, 0.0
    %454 = vadd.xlane.f32.xlu0 %v453
    %v455 = vpop.xlane.xlu0 %454
    %v456 = vsel %vm99, %v452, 0.0
    %457 = vadd.xlane.f32.xlu0 %v456
    %v458 = vpop.xlane.xlu0 %457
    %v459 = vmul.f32 %v455, %v112
    %v460 = vmul.f32 %v458, %v112
    %v461 = vadd.f32 %v459, 1e-05
    %v462 = vadd.f32 %v460, 1e-05
    %v463 = vrsqrt.pop %v461
    %v464 = vmul.f32 %v463, %v461
    %v465 = vmul.f32 %v464, %v463
    %v466 = vmul.f32 0.5, %v465
    %v467 = vsub.f32 1.5, %v466
    %v468 = vmul.f32 %v463, %v467
    %vm469 = vweird.f32 %v461
    %vm470 = vweird.f32 %v463
    %vm471 = vmor %vm469, %vm470
    %v472 = vsel %vm471, %v463, %v468
    %v473 = vrsqrt.pop %v462
    %v474 = vmul.f32 %v473, %v462
    %v475 = vmul.f32 %v474, %v473
    %v476 = vmul.f32 0.5, %v475
    %v477 = vsub.f32 1.5, %v476
    %v478 = vmul.f32 %v473, %v477
    %vm479 = vweird.f32 %v462
    %vm480 = vweird.f32 %v473
    %vm481 = vmor %vm479, %vm480
    %v482 = vsel %vm481, %v473, %v478
    %v483 = vmul.f32 %v449, %v472
    %v484 = vmul.f32 %v450, %v482
    %v486 = vperm.slane %v438, 0
    %v488 = vmul.f32 %v483, %v486
    %v489 = vmul.f32 %v484, %v486
    %v491 = vperm.slane %v440, 0
    %v493 = vadd.f32 %v488, %v491
    %v494 = vadd.f32 %v489, %v491
    %v495 = vpack.c.bf16 %v494, %v493
    %s496 = scalar_lea.vmem %s5, 16
    %v497 = vld [vmem:[%s496] sm:$0xf]
    %v498 = vld [vmem:[%s496 + $0x4] sm:$0xf]
    %v499 = vld [vmem:[%s496 + $0x8] sm:$0xf]
    %v500 = vld [vmem:[%s496 + $0xc] sm:$0xf]
    %s501 = scalar_lea.vmem %s6, 1
    %v502 = vld [vmem:[%s501] sm:$0x1]
    %v504 = vperm.slane %v502, 0
    %v510 = vunpack.c.l.b16 %v497
    %v511 = vunpack.c.l.b16 %v498
    %v512 = vunpack.c.l.b16 %v499
    %v513 = vunpack.c.l.b16 %v500
    %v514 = vpack.c.b16 %v511, %v510
    %v515 = vpack.c.b16 %v513, %v512
    %v519 = vsel %vm99, %v495, 0
    %521 = vmatpush.bf16.msra.mxu0 0
    %522 = vmatpush.bf16.msra.mxu0 0
    %523 = vmatpush.bf16.msra.mxu0 0
    %524 = vmatpush.bf16.msra.mxu0 0
    %525 = vmatpush.bf16.msra.mxu0 0
    %526 = vmatpush.bf16.msra.mxu0 0
    %527 = vmatpush.bf16.msra.mxu0 %v515
    %528 = vmatpush.bf16.msra.mxu0 %v514
    %529 = vmatmul.bf16.gmra.mxu0 %v519
    %v530 = vpop.f32.mrf.mxu0
    %v531 = vadd.f32 %v504, %v530
    %v532 = vpop.f32.mrf.mxu0
    %v533 = vadd.f32 %v504, %v532
    %534 = vdwg.mxu0
    %v535 = vmul.f32 %v531, %v531
    %v536 = vmul.f32 %v533, %v533
    %v537 = vmul.f32 %v531, %v535
    %v538 = vmul.f32 %v533, %v536
    %v539 = vmul.f32 %v537, 0.044715
    %v540 = vmul.f32 %v538, 0.044715
    %v541 = vadd.f32 %v531, %v539
    %v542 = vadd.f32 %v533, %v540
    %v543 = vmul.f32 %v541, 0.7978846
    %v544 = vmul.f32 %v542, 0.7978846
    %v545 = vtanh.pop %v543
    %v546 = vtanh.pop %v544
    %v547 = vadd.f32 %v545, 1.0
    %v548 = vadd.f32 %v546, 1.0
    %v549 = vmul.f32 %v547, 0.5
    %v550 = vmul.f32 %v548, 0.5
    %v551 = vmul.f32 %v531, %v549
    %v552 = vmul.f32 %v533, %v550
    %s553 = scalar_lea.vmem %s7, 16
    %v554 = vld [vmem:[%s553] sm:$0xf]
    %v555 = vld [vmem:[%s553 + $0x4] sm:$0xf]
    %v556 = vld [vmem:[%s553 + $0x8] sm:$0xf]
    %v557 = vld [vmem:[%s553 + $0xc] sm:$0xf]
    %s558 = scalar_lea.vmem %s8, 1
    %v559 = vld [vmem:[%s558] sm:$0x1]
    %v561 = vperm.slane %v559, 0
    %v567 = vunpack.c.l.b16 %v554
    %v568 = vunpack.c.l.b16 %v555
    %v569 = vunpack.c.l.b16 %v556
    %v570 = vunpack.c.l.b16 %v557
    %v571 = vpack.c.b16 %v568, %v567
    %v572 = vpack.c.b16 %v570, %v569
    %575 = vmatpush.bf16.msra.mxu0 0
    %576 = vmatpush.bf16.msra.mxu0 0
    %577 = vmatpush.bf16.msra.mxu0 0
    %578 = vmatpush.bf16.msra.mxu0 0
    %579 = vmatpush.bf16.msra.mxu0 0
    %580 = vmatpush.bf16.msra.mxu0 0
    %581 = vmatpush.bf16.msra.mxu0 %v572
    %582 = vmatpush.bf16.msra.mxu0 %v571
    %583 = vmatmul.bf16.gmra.mxu0 %v519
    %v584 = vpop.f32.mrf.mxu0
    %v585 = vadd.f32 %v561, %v584
    %v586 = vpop.f32.mrf.mxu0
    %v587 = vadd.f32 %v561, %v586
    %588 = vdwg.mxu0
    %v589 = vmul.f32 %v585, %v585
    %v590 = vmul.f32 %v587, %v587
    %v591 = vmul.f32 %v585, %v589
    %v592 = vmul.f32 %v587, %v590
    %v593 = vmul.f32 %v591, 0.044715
    %v594 = vmul.f32 %v592, 0.044715
    %v595 = vadd.f32 %v585, %v593
    %v596 = vadd.f32 %v587, %v594
    %v597 = vmul.f32 %v595, 0.7978846
    %v598 = vmul.f32 %v596, 0.7978846
    %v599 = vtanh.pop %v597
    %v600 = vtanh.pop %v598
    %v601 = vadd.f32 %v599, 1.0
    %v602 = vadd.f32 %v600, 1.0
    %v603 = vmul.f32 %v601, 0.5
    %v604 = vmul.f32 %v602, 0.5
    %v605 = vmul.f32 %v585, %v603
    %v606 = vmul.f32 %v587, %v604
    %s607 = scalar_lea.vmem %s9, 1
    %v608 = vld [vmem:[%s607] sm:$0x1]
    %s609 = scalar_lea.vmem %s10, 1
    %v610 = vld [vmem:[%s609] sm:$0x1]
    %v611 = vsel %vm271, %v605, 0.0
    %612 = vadd.xlane.f32.xlu0 %v611
    %v613 = vpop.xlane.xlu0 %612
    %v614 = vsel %vm271, %v606, 0.0
    %615 = vadd.xlane.f32.xlu0 %v614
    %v616 = vpop.xlane.xlu0 %615
    %v617 = vmul.f32 %v613, %v284
    %v618 = vmul.f32 %v616, %v284
    %v619 = vsub.f32 %v605, %v617
    %v620 = vsub.f32 %v606, %v618
    %v621 = vmul.f32 %v619, %v619
    %v622 = vmul.f32 %v620, %v620
    %v623 = vsel %vm271, %v621, 0.0
    %624 = vadd.xlane.f32.xlu0 %v623
    %v625 = vpop.xlane.xlu0 %624
    %v626 = vsel %vm271, %v622, 0.0
    %627 = vadd.xlane.f32.xlu0 %v626
    %v628 = vpop.xlane.xlu0 %627
    %v629 = vmul.f32 %v625, %v284
    %v630 = vmul.f32 %v628, %v284
    %v631 = vadd.f32 %v629, 1e-05
    %v632 = vadd.f32 %v630, 1e-05
    %v633 = vrsqrt.pop %v631
    %v634 = vmul.f32 %v633, %v631
    %v635 = vmul.f32 %v634, %v633
    %v636 = vmul.f32 0.5, %v635
    %v637 = vsub.f32 1.5, %v636
    %v638 = vmul.f32 %v633, %v637
    %vm639 = vweird.f32 %v631
    %vm640 = vweird.f32 %v633
    %vm641 = vmor %vm639, %vm640
    %v642 = vsel %vm641, %v633, %v638
    %v643 = vrsqrt.pop %v632
    %v644 = vmul.f32 %v643, %v632
    %v645 = vmul.f32 %v644, %v643
    %v646 = vmul.f32 0.5, %v645
    %v647 = vsub.f32 1.5, %v646
    %v648 = vmul.f32 %v643, %v647
    %vm649 = vweird.f32 %v632
    %vm650 = vweird.f32 %v643
    %vm651 = vmor %vm649, %vm650
    %v652 = vsel %vm651, %v643, %v648
    %v653 = vmul.f32 %v619, %v642
    %v654 = vmul.f32 %v620, %v652
    %v656 = vperm.slane %v608, 0
    %v658 = vmul.f32 %v653, %v656
    %v659 = vmul.f32 %v654, %v656
    %v661 = vperm.slane %v610, 0
    %v663 = vadd.f32 %v658, %v661
    %v664 = vadd.f32 %v659, %v661
    %s665 = scalar_lea.vmem %s11, 8
    %v666 = vld [vmem:[%s665] sm:$0xff]
    %s667 = scalar_lea.vmem %s12, 8
    %v668 = vld [vmem:[%s667] sm:$0xff]
    %v670 = vsel %vm335, %v666, 0
    %672 = vmatpush.msra.mxu0 0.0
    %673 = vmatpush.msra.mxu0 0.0
    %674 = vmatpush.msra.mxu0 0.0
    %675 = vmatpush.msra.mxu0 0.0
    %676 = vmatpush.msra.mxu0 0.0
    %677 = vmatpush.msra.mxu0 0.0
    %678 = vmatpush.msra.mxu0 0.0
    %679 = vmatpush.msra.mxu0 0.0
    %680 = vmatpush.msra.mxu0 0.0
    %681 = vmatpush.msra.mxu0 0.0
    %682 = vmatpush.msra.mxu0 0.0
    %683 = vmatpush.msra.mxu0 0.0
    %684 = vmatpush.msra.mxu0 0.0
    %685 = vmatpush.msra.mxu0 0.0
    %686 = vmatpush.msra.mxu0 0.0
    %687 = vmatpush.msra.mxu0 %v663
    %688 = vmatmul.f32.gmra.mxu0 %v670
    %v689 = vpop.f32.mrf.mxu0
    %v690 = vadd.f32 %v668, %v689
    %691 = vdwg.mxu0
    %692 = vmatpush.msra.mxu0 0.0
    %693 = vmatpush.msra.mxu0 0.0
    %694 = vmatpush.msra.mxu0 0.0
    %695 = vmatpush.msra.mxu0 0.0
    %696 = vmatpush.msra.mxu0 0.0
    %697 = vmatpush.msra.mxu0 0.0
    %698 = vmatpush.msra.mxu0 0.0
    %699 = vmatpush.msra.mxu0 0.0
    %700 = vmatpush.msra.mxu0 0.0
    %701 = vmatpush.msra.mxu0 0.0
    %702 = vmatpush.msra.mxu0 0.0
    %703 = vmatpush.msra.mxu0 0.0
    %704 = vmatpush.msra.mxu0 0.0
    %705 = vmatpush.msra.mxu0 0.0
    %706 = vmatpush.msra.mxu0 0.0
    %707 = vmatpush.msra.mxu0 %v664
    %708 = vmatmul.f32.gmra.mxu0 %v670
    %v709 = vpop.f32.mrf.mxu0
    %v710 = vadd.f32 %v668, %v709
    %711 = vdwg.mxu0
    %v712 = vmul.f32 %v690, %v551
    %v713 = vmul.f32 %v710, %v552
    %v714 = vpack.c.bf16 %v713, %v712
    %s715 = scalar_lea.vmem %s13, 32
    %v716 = vld [vmem:[%s715] sm:$0xf]
    %v717 = vld [vmem:[%s715 + $0x4] sm:$0xf]
    %v718 = vld [vmem:[%s715 + $0x8] sm:$0xf]
    %v719 = vld [vmem:[%s715 + $0xc] sm:$0xf]
    %v720 = vld [vmem:[%s715 + $0x10] sm:$0xf]
    %v721 = vld [vmem:[%s715 + $0x14] sm:$0xf]
    %v722 = vld [vmem:[%s715 + $0x18] sm:$0xf]
    %v723 = vld [vmem:[%s715 + $0x1c] sm:$0xf]
    %s724 = scalar_lea.vmem %s14, 1
    %v725 = vld [vmem:[%s724] sm:$0x1]
    %v727 = vperm.slane %v725, 0
    %v737 = vunpack.c.l.b16 %v716
    %v738 = vunpack.c.l.b16 %v717
    %v739 = vunpack.c.l.b16 %v718
    %v740 = vunpack.c.l.b16 %v719
    %v741 = vunpack.c.l.b16 %v720
    %v742 = vunpack.c.l.b16 %v721
    %v743 = vunpack.c.l.b16 %v722
    %v744 = vunpack.c.l.b16 %v723
    %v745 = vpack.c.b16 %v738, %v737
    %v746 = vpack.c.b16 %v740, %v739
    %v747 = vpack.c.b16 %v742, %v741
    %v748 = vpack.c.b16 %v744, %v743
    %v754 = vsel %vm271, %v714, 0
    %756 = vmatpush.bf16.msra.mxu0 0
    %757 = vmatpush.bf16.msra.mxu0 0
    %758 = vmatpush.bf16.msra.mxu0 0
    %759 = vmatpush.bf16.msra.mxu0 0
    %760 = vmatpush.bf16.msra.mxu0 %v748
    %761 = vmatpush.bf16.msra.mxu0 %v747
    %762 = vmatpush.bf16.msra.mxu0 %v746
    %763 = vmatpush.bf16.msra.mxu0 %v745
    %764 = vmatmul.bf16.gmra.mxu0 %v754
    %v765 = vpop.f32.mrf.mxu0
    %v766 = vadd.f32 %v727, %v765
    %v767 = vpop.f32.mrf.mxu0
    %v768 = vadd.f32 %v727, %v767
    %769 = vdwg.mxu0
    %v770 = vadd.f32 %v766, %v435
    %v771 = vadd.f32 %v768, %v436
    %v772 = vld [vmem:[%s15] sm:$0x3]
    %vm773 = vcmask 130048
    %v775 = vsel %vm773, %v772, 0
    %777 = vmatpush.msra.mxu0 0.0
    %778 = vmatpush.msra.mxu0 0.0
    %779 = vmatpush.msra.mxu0 0.0
    %780 = vmatpush.msra.mxu0 0.0
    %781 = vmatpush.msra.mxu0 0.0
    %782 = vmatpush.msra.mxu0 0.0
    %783 = vmatpush.msra.mxu0 0.0
    %784 = vmatpush.msra.mxu0 0.0
    %785 = vmatpush.msra.mxu0 0.0
    %786 = vmatpush.msra.mxu0 0.0
    %787 = vmatpush.msra.mxu0 0.0
    %788 = vmatpush.msra.mxu0 0.0
    %789 = vmatpush.msra.mxu0 0.0
    %790 = vmatpush.msra.mxu0 0.0
    %791 = vmatpush.msra.mxu0 %v771
    %792 = vmatpush.msra.mxu0 %v770
    %793 = vmatmul.f32.gmra.mxu0 %v775
    %v794 = vpop.f32.mrf.mxu0
    %v795 = vadd.f32 0.0, %v794
    %796 = vdwg.mxu0
    %v797 = vld [vmem:[%s16] sm:$0x1]
    %v798 = vld [vmem:[%s17] sm:$0x1]
    %vm799 = vcmask 254976
    %v800 = vsel %vm799, %v795, 0.0
    %801 = vadd.xlane.f32.xlu0 %v800
    %v802 = vpop.xlane.xlu0 %801
    %v803 = vmul.f32 %v802, %v112
    %v804 = vsub.f32 %v795, %v803
    %v805 = vmul.f32 %v804, %v804
    %v806 = vsel %vm799, %v805, 0.0
    %807 = vadd.xlane.f32.xlu0 %v806
    %v808 = vpop.xlane.xlu0 %807
    %v809 = vmul.f32 %v808, %v112
    %v810 = vadd.f32 %v809, 1e-05
    %v811 = vrsqrt.pop %v810
    %v812 = vmul.f32 %v811, %v810
    %v813 = vmul.f32 %v812, %v811
    %v814 = vmul.f32 0.5, %v813
    %v815 = vsub.f32 1.5, %v814
    %v816 = vmul.f32 %v811, %v815
    %vm817 = vweird.f32 %v810
    %vm818 = vweird.f32 %v811
    %vm819 = vmor %vm817, %vm818
    %v820 = vsel %vm819, %v811, %v816
    %v821 = vmul.f32 %v804, %v820
    %v823 = vperm.slane %v797, 0
    %v825 = vmul.f32 %v821, %v823
    %v827 = vperm.slane %v798, 0
    %v829 = vadd.f32 %v825, %v827
    %v830 = vpack.c.bf16 %v829, %v829
    %v831 = vld [vmem:[%s18] sm:$0xf]
    %v832 = vld [vmem:[%s18 + $0x4] sm:$0xf]
    %v833 = vld [vmem:[%s18 + $0x8] sm:$0xf]
    %v834 = vld [vmem:[%s18 + $0xc] sm:$0xf]
    %v835 = vld [vmem:[%s19] sm:$0x1]
    %v837 = vperm.slane %v835, 0
    %v843 = vunpack.c.l.b16 %v831
    %v844 = vunpack.c.l.b16 %v832
    %v845 = vunpack.c.l.b16 %v833
    %v846 = vunpack.c.l.b16 %v834
    %v847 = vpack.c.b16 %v844, %v843
    %v848 = vpack.c.b16 %v846, %v845
    %v852 = vsel %vm99, %v830, 0
    %854 = vmatpush.bf16.msra.mxu0 0
    %855 = vmatpush.bf16.msra.mxu0 0
    %856 = vmatpush.bf16.msra.mxu0 0
    %857 = vmatpush.bf16.msra.mxu0 0
    %858 = vmatpush.bf16.msra.mxu0 0
    %859 = vmatpush.bf16.msra.mxu0 0
    %860 = vmatpush.bf16.msra.mxu0 %v848
    %861 = vmatpush.bf16.msra.mxu0 %v847
    %862 = vmatmul.bf16.gmra.mxu0 %v852
    %v863 = vpop.f32.mrf.mxu0
    %v864 = vadd.f32 %v837, %v863
    %v865 = vpop.f32.mrf.mxu0
    %866 = vdwg.mxu0
    %867 = vst [vmem:[#allocation2] sm:$0x3] %v864
    // Predicated region
    $region82: #{gmlp_forward.1} parent=1 // pred_check
      _
    $region83: #{gmlp_forward.1} parent=1 // pred_check_branch
      %869 = sbr.rel (0) target = $region85
    $region84: #{gmlp_forward.1} parent=1 // pred_region
      %871 = vsyncadd [#allocation3], 0
      %s873 = sshll.u32 [#allocation2], 4
      %s874 = int_to_ptr.vmem [resolvable:$true] %s873
      %s875 = sshll.u32 %s20, 4
      %s876 = int_to_ptr.hbm [resolvable:$true] %s875
      %878 = dma.vmem_to_hbm [thread:$0]  %s874, 32, %s876, [#allocation3]
    $region85: #{gmlp_forward.1} parent=1 // pred_fallthru
      _
    // Predicated region
    $region86: #{gmlp_forward.1} parent=1 // pred_check
      _
    $region87: #{gmlp_forward.1} parent=1 // pred_check_branch
      %880 = sbr.rel (0) target = $region89
    $region88: #{gmlp_forward.1} parent=1 // pred_region
      %882 = dma.done [#allocation3], 32
    $region89: #{gmlp_forward.1} parent=1 // pred_fallthru
      _
    %883 = vsyncpa [#allocation3], 1

</llo_original>
